<compile_context>
chip_gen: v5e
topology: v5e:2x2
jax: 0.10.0
libtpu: 0.0.40
codegen_flags: <defaults>
</compile_context>

<pallas_src>
import functools
import math

import jax
import jax.numpy as jnp
from jax.experimental import pallas as pl
from jax.experimental.pallas import tpu as pltpu

N_BINS = 11              # FPFH = 3 sub-histograms x 11 bins = 33 features
FEAT_PAD = 128           # lane-dense padded feature width
TM = 128                 # query-point tile (lane aligned)
_VMEM_LIMIT = 48 * 1024 * 1024   # safe on v5e/v6e (128 MiB) and v7x (64 MiB/TC)


def _query_cols(tile_ref):
    """(8, TM) coordinate-major tile -> three (TM, 1) query columns."""
    t = jnp.transpose(tile_ref[...])                     # (TM, 8)
    return t[:, 0:1], t[:, 1:2], t[:, 2:3]


def _pair_deltas(xyz_all_ref, xyz_q_ref):
    rows = xyz_all_ref[...]                              # (8, N)
    xs, ys, zs = rows[0:1, :], rows[1:2, :], rows[2:3, :]        # (1, N) neighbors
    xc, yc, zc = _query_cols(xyz_q_ref)                          # (TM, 1) queries
    dx = xs - xc
    dy = ys - yc
    dz = zs - zc
    dist2 = dx * dx + dy * dy + dz * dz                  # (TM, N)
    return dx, dy, dz, dist2


# --------------------------- pass 1: normals ---------------------------------
def _normals_kernel(xyz_all_ref, xyz_q_ref, mom_ref, nrm_ref, *, r_normal):
    f32 = jnp.float32
    _, _, _, dist2 = _pair_deltas(xyz_all_ref, xyz_q_ref)
    mask_n = (dist2 <= r_normal * r_normal).astype(f32)  # includes the point itself

    # 10 covariance moments with one MXU matmul: (TM, N) x (N, 16) -> (TM, 16)
    moments = jnp.dot(mask_n, mom_ref[...], preferred_element_type=f32)
    mt = jnp.transpose(moments)                          # (16, TM), lane-major per point

    cnt = mt[0:1, :]
    sx, sy, sz = mt[1:2, :], mt[2:3, :], mt[3:4, :]
    sxx, sxy, sxz = mt[4:5, :], mt[5:6, :], mt[6:7, :]
    syy, syz, szz = mt[7:8, :], mt[8:9, :], mt[9:10, :]

    inv_cnt = 1.0 / jnp.maximum(cnt, 1.0)
    mx, my, mz = sx * inv_cnt, sy * inv_cnt, sz * inv_cnt
    a00 = sxx * inv_cnt - mx * mx
    a01 = sxy * inv_cnt - mx * my
    a02 = sxz * inv_cnt - mx * mz
    a11 = syy * inv_cnt - my * my
    a12 = syz * inv_cnt - my * mz
    a22 = szz * inv_cnt - mz * mz

    # scale covariance (eigenvectors are scale-invariant) for f32 conditioning
    inv_scale = 1.0 / jnp.maximum(a00 + a11 + a22, 1e-12)
    a00, a01, a02 = a00 * inv_scale, a01 * inv_scale, a02 * inv_scale
    a11, a12, a22 = a11 * inv_scale, a12 * inv_scale, a22 * inv_scale

    # smallest eigenvalue of the 3x3 PSD covariance: Newton on det(A - l I),
    # monotone convergence from below starting at 0 (no acos/atan needed).
    c2 = a00 + a11 + a22
    c1 = (a00 * a11 - a01 * a01) + (a00 * a22 - a02 * a02) + (a11 * a22 - a12 * a12)
    c0 = (a00 * (a11 * a22 - a12 * a12)
          - a01 * (a01 * a22 - a12 * a02)
          + a02 * (a01 * a12 - a11 * a02))
    lam = jnp.zeros_like(c0)
    for _ in range(16):
        pval = ((c2 - lam) * lam - c1) * lam + c0
        pder = (2.0 * c2 - 3.0 * lam) * lam - c1
        ok = jnp.abs(pder) > 1e-20
        lam = lam - jnp.where(ok, pval / jnp.where(ok, pder, 1.0), 0.0)

    m00, m11, m22 = a00 - lam, a11 - lam, a22 - lam
    # null-space direction = cross products of rows of (A - lam I); keep the largest
    v0x = a01 * a12 - a02 * m11
    v0y = a02 * a01 - m00 * a12
    v0z = m00 * m11 - a01 * a01
    v1x = a01 * m22 - a02 * a12
    v1y = a02 * a02 - m00 * m22
    v1z = m00 * a12 - a01 * a02
    v2x = m11 * m22 - a12 * a12
    v2y = a12 * a02 - a01 * m22
    v2z = a01 * a12 - m11 * a02
    q0 = v0x * v0x + v0y * v0y + v0z * v0z
    q1 = v1x * v1x + v1y * v1y + v1z * v1z
    q2 = v2x * v2x + v2y * v2y + v2z * v2z
    use1 = q1 > q0
    bx = jnp.where(use1, v1x, v0x)
    by = jnp.where(use1, v1y, v0y)
    bz = jnp.where(use1, v1z, v0z)
    bq = jnp.where(use1, q1, q0)
    use2 = q2 > bq
    bx = jnp.where(use2, v2x, bx)
    by = jnp.where(use2, v2y, by)
    bz = jnp.where(use2, v2z, bz)
    bq = jnp.where(use2, q2, bq)
    degen = bq < 1e-20
    inv_nrm = jax.lax.rsqrt(jnp.maximum(bq, 1e-30))
    nx = jnp.where(degen, 0.0, bx * inv_nrm)             # (1, TM)
    ny = jnp.where(degen, 0.0, by * inv_nrm)
    nz = jnp.where(degen, 1.0, bz * inv_nrm)             # Open3D falls back to (0,0,1)

    tm = nx.shape[1]
    sub = jax.lax.broadcasted_iota(jnp.int32, (8, tm), 0)
    nrm_ref[...] = (nx * (sub == 0).astype(f32)
                    + ny * (sub == 1).astype(f32)
                    + nz * (sub == 2).astype(f32))       # (8, TM), lane-dense store


# --------------------------- pass 2: SPFH ------------------------------------
def _spfh_kernel(xyz_all_ref, xyz_q_ref, nrm_all_ref, nrm_q_ref, spfh_ref, *,
                 r_feature):
    f32 = jnp.float32
    dx, dy, dz, dist2 = _pair_deltas(xyz_all_ref, xyz_q_ref)

    nrows = nrm_all_ref[...]                             # (8, N) neighbor normals
    n2x, n2y, n2z = nrows[0:1, :], nrows[1:2, :], nrows[2:3, :]
    n1x, n1y, n1z = _query_cols(nrm_q_ref)               # (TM, 1) query normals

    valid = jnp.logical_and(dist2 <= r_feature * r_feature, dist2 > 0.0)
    inv_dist = jnp.where(valid, jax.lax.rsqrt(jnp.maximum(dist2, 1e-30)), 0.0)

    # Open3D ComputePairFeatures (Darboux frame angles)
    angle1 = (n1x * dx + n1y * dy + n1z * dz) * inv_dist
    angle2 = (n2x * dx + n2y * dy + n2z * dz) * inv_dist
    swap = jnp.abs(angle1) < jnp.abs(angle2)             # == acos(|a1|) > acos(|a2|)

    s1x = jnp.where(swap, n2x, n1x)
    s1y = jnp.where(swap, n2y, n1y)
    s1z = jnp.where(swap, n2z, n1z)
    s2x = jnp.where(swap, n1x, n2x)
    s2y = jnp.where(swap, n1y, n2y)
    s2z = jnp.where(swap, n1z, n2z)
    ddx = jnp.where(swap, -dx, dx)
    ddy = jnp.where(swap, -dy, dy)
    ddz = jnp.where(swap, -dz, dz)
    f3 = jnp.where(swap, -angle2, angle1)

    vx = ddy * s1z - ddz * s1y
    vy = ddz * s1x - ddx * s1z
    vz = ddx * s1y - ddy * s1x
    inv_vn = jax.lax.rsqrt(jnp.maximum(vx * vx + vy * vy + vz * vz, 1e-30))
    vx, vy, vz = vx * inv_vn, vy * inv_vn, vz * inv_vn
    wx = s1y * vz - s1z * vy
    wy = s1z * vx - s1x * vz
    wz = s1x * vy - s1y * vx

    f2 = vx * s2x + vy * s2y + vz * s2z
    yv = wx * s2x + wy * s2y + wz * s2z                  # atan2 numerator   of f0
    xv = s1x * s2x + s1y * s2y + s1z * s2z               # atan2 denominator of f0
    # TODO(synk): Open3D zeroes all pair features when d is parallel to n1
    #             (v_norm == 0); that measure-zero case is not special-cased here.

    # perpendicular/parallel degenerate pairs: atan2(0, 0) = 0 in Open3D -> angle 0
    degp = jnp.logical_and(jnp.abs(yv) < 1e-20, jnp.abs(xv) < 1e-20)
    xv = jnp.where(degp, 1.0, xv)
    # invalid pairs -> (0, 0) so they satisfy no sector test of histogram 0
    xv = jnp.where(valid, xv, 0.0)
    yv = jnp.where(valid, yv, 0.0)

    half = 0.5 * N_BINS
    b1 = jnp.clip(jnp.floor(half * (f2 + 1.0)), 0.0, N_BINS - 1.0)
    b1 = jnp.where(valid, b1, -1.0)                      # pre-masked: invalid hits no bin
    b2 = jnp.clip(jnp.floor(half * (f3 + 1.0)), 0.0, N_BINS - 1.0)
    b2 = jnp.where(valid, b2, -1.0)

    cnt_f = jnp.sum(valid.astype(f32), axis=1, keepdims=True)
    hist_incr = jnp.where(cnt_f > 0.0, 100.0 / jnp.maximum(cnt_f, 1.0), 0.0)

    # f0 = atan2(yv, xv) is only needed through its 11-way bin over [-pi, pi):
    # sector membership via rolling 2-D cross products against the bin boundaries
    # (only 2 live (TM, N) boundary planes, no atan2 primitive required).
    h0, h1, h2 = [], [], []
    prev = math.cos(-math.pi) * yv - math.sin(-math.pi) * xv
    for b in range(N_BINS):
        th = -math.pi + 2.0 * math.pi * (b + 1) / N_BINS
        cur = math.cos(th) * yv - math.sin(th) * xv
        in0 = jnp.logical_and(prev >= 0.0, cur < 0.0)
        h0.append(jnp.sum(in0.astype(f32), axis=1, keepdims=True))
        h1.append(jnp.sum((b1 == float(b)).astype(f32), axis=1, keepdims=True))
        h2.append(jnp.sum((b2 == float(b)).astype(f32), axis=1, keepdims=True))
        prev = cur

    spfh = jnp.concatenate(h0 + h1 + h2, axis=1) * hist_incr        # (TM, 33)
    pad = jnp.zeros((spfh.shape[0], FEAT_PAD - 3 * N_BINS), f32)
    spfh_ref[...] = jnp.concatenate([spfh, pad], axis=1)            # lane-dense store


# --------------------------- pass 3: FPFH combine -----------------------------
def _fpfh_kernel(xyz_all_ref, xyz_q_ref, spfh_all_ref, spfh_q_ref, fpfh_ref, *,
                 r_feature):
    f32 = jnp.float32
    _, _, _, dist2 = _pair_deltas(xyz_all_ref, xyz_q_ref)
    valid = jnp.logical_and(dist2 <= r_feature * r_feature, dist2 > 0.0)
    inv_d = jax.lax.rsqrt(jnp.maximum(dist2, 1e-30))
    wmat = jnp.where(valid, inv_d * inv_d, 0.0)                     # 1/d^2 weights

    # one fused (TM, N) x (N, 128) MXU matmul over all 33 (padded) SPFH columns
    acc = jnp.dot(wmat, spfh_all_ref[...], preferred_element_type=f32)   # (TM, 128)

    s0 = jnp.sum(acc[:, 0 * N_BINS:1 * N_BINS], axis=1, keepdims=True)
    s1 = jnp.sum(acc[:, 1 * N_BINS:2 * N_BINS], axis=1, keepdims=True)
    s2 = jnp.sum(acc[:, 2 * N_BINS:3 * N_BINS], axis=1, keepdims=True)
    sc0 = jnp.where(s0 > 0.0, 100.0 / jnp.maximum(s0, 1e-30), 0.0)
    sc1 = jnp.where(s1 > 0.0, 100.0 / jnp.maximum(s1, 1e-30), 0.0)
    sc2 = jnp.where(s2 > 0.0, 100.0 / jnp.maximum(s2, 1e-30), 0.0)

    lane = jax.lax.broadcasted_iota(jnp.int32, acc.shape, 1)
    scale = jnp.where(lane < N_BINS, sc0, jnp.where(lane < 2 * N_BINS, sc1, sc2))
    fpfh_ref[...] = acc * scale + spfh_q_ref[...]                   # lane-dense store


# --------------------------- wrapper ------------------------------------------
def fpfh_forward(xyz, radius_normal=0.1, radius_feature=0.2, neighbor=30):
    """JAX/Pallas equivalent of FPFH.forward.  xyz: (N, 3) point cloud.

    Returns (fpfh (N, 33) float32, normals (N, 3) float32)."""
    del neighbor  # TODO(synk): max_nn cap of the hybrid KD-tree search not implemented
    n = xyz.shape[0]
    xyz = xyz.astype(jnp.float32)
    # normals / FPFH are translation invariant: center for f32 conditioning
    xyz = xyz - jnp.mean(xyz, axis=0, keepdims=True)

    n_pad = max(TM, ((n + TM - 1) // TM) * TM)
    pad = n_pad - n
    if pad:
        # pad points placed far outside every radius so they never join a neighborhood
        far = 1.0e6 + 1.0e3 * jnp.arange(pad, dtype=jnp.float32)
        xyz = jnp.concatenate([xyz, jnp.stack([far, far, far], axis=1)], axis=0)

    # coordinate-major, sublane-padded slab: rows 0..2 = x,y,z, points on lanes
    xyz8 = jnp.zeros((8, n_pad), jnp.float32).at[0:3, :].set(xyz.T)
    # moment matrix for the MXU covariance pass: [1, x, y, z, x2, xy, xz, y2, yz, z2, 0..]
    x, y, z = xyz[:, 0], xyz[:, 1], xyz[:, 2]
    ones = jnp.ones_like(x)
    zeros = jnp.zeros_like(x)
    mom = jnp.stack([ones, x, y, z, x * x, x * y, x * z, y * y, y * z, z * z,
                     zeros, zeros, zeros, zeros, zeros, zeros], axis=1)   # (n_pad, 16)

    grid = (n_pad // TM,)
    cparams = pltpu.CompilerParams(
        dimension_semantics=("parallel",),
        vmem_limit_bytes=_VMEM_LIMIT)

    full8 = pl.BlockSpec((8, n_pad), lambda i: (0, 0))        # resident, never re-DMAed
    tile8 = pl.BlockSpec((8, TM), lambda i: (0, i))           # per-tile query columns
    full_feat = pl.BlockSpec((n_pad, FEAT_PAD), lambda i: (0, 0))
    tile_feat = pl.BlockSpec((TM, FEAT_PAD), lambda i: (i, 0))

    nrm8 = pl.pallas_call(
        functools.partial(_normals_kernel, r_normal=float(radius_normal)),
        grid=grid,
        in_specs=[full8, tile8, pl.BlockSpec((n_pad, 16), lambda i: (0, 0))],
        out_specs=tile8,
        out_shape=jax.ShapeDtypeStruct((8, n_pad), jnp.float32),
        compiler_params=cparams,
    )(xyz8, xyz8, mom)

    spfh = pl.pallas_call(
        functools.partial(_spfh_kernel, r_feature=float(radius_feature)),
        grid=grid,
        in_specs=[full8, tile8, full8, tile8],
        out_specs=tile_feat,
        out_shape=jax.ShapeDtypeStruct((n_pad, FEAT_PAD), jnp.float32),
        compiler_params=cparams,
    )(xyz8, xyz8, nrm8, nrm8)

    fpfh = pl.pallas_call(
        functools.partial(_fpfh_kernel, r_feature=float(radius_feature)),
        grid=grid,
        in_specs=[full8, tile8, full_feat, tile_feat],
        out_specs=tile_feat,
        out_shape=jax.ShapeDtypeStruct((n_pad, FEAT_PAD), jnp.float32),
        compiler_params=cparams,
    )(xyz8, xyz8, spfh, spfh)

    return fpfh[:n, :3 * N_BINS], jnp.transpose(nrm8[0:3, :n])


if __name__ == "__main__":
    key = jax.random.PRNGKey(0)
    n = 200  # deliberately not a multiple of 128 to exercise the padding path
    # points inside a 0.4-sided cube so radius_normal=0.1 / radius_feature=0.2
    # neighborhoods are non-trivial
    xyz = jax.random.uniform(key, (n, 3), dtype=jnp.float32) * 0.4

    feats, normals = fpfh_forward(xyz)
    feats, normals = jax.block_until_ready((feats, normals))

    assert feats.shape == (n, 33) and feats.dtype == jnp.float32
    assert normals.shape == (n, 3) and normals.dtype == jnp.float32
    assert bool(jnp.all(jnp.isfinite(feats))) and bool(jnp.all(jnp.isfinite(normals)))
    print("KERNEL_OK")
</pallas_src>

<mosaic_0001>
module attributes {stable_mosaic.version = 11 : i64} {
  func.func @_normals_kernel(%arg0: i32, %arg1: memref<8x256xf32, #tpu.memory_space<vmem>>, %arg2: memref<8x128xf32, #tpu.memory_space<vmem>>, %arg3: memref<256x16xf32, #tpu.memory_space<vmem>>, %arg4: memref<8x128xf32, #tpu.memory_space<vmem>>) attributes {dimension_semantics = [#tpu.dimension_semantics<parallel>], iteration_bounds = array<i64: 2>, scalar_prefetch = 0 : i64, scratch_operands = 0 : i64, tpu.core_type = #tpu.core_type<tc>, window_params = [{pipeline_mode = #tpu.pipeline_mode<synchronous>, transform_indices = @transform_0, window_bounds = array<i64: 8, 256>}, {transform_indices = @transform_1, window_bounds = array<i64: 8, 128>}, {pipeline_mode = #tpu.pipeline_mode<synchronous>, transform_indices = @transform_2, window_bounds = array<i64: 256, 16>}, {transform_indices = @transform_3, window_bounds = array<i64: 8, 128>}]} {
    %c0 = arith.constant 0 : index
    %c0_0 = arith.constant 0 : index
    %0 = vector.load %arg1[%c0, %c0_0] : memref<8x256xf32, #tpu.memory_space<vmem>>, vector<8x256xf32>
    %1 = vector.extract_strided_slice %0 {offsets = [0, 0], sizes = [1, 256], strides = [1, 1]} : vector<8x256xf32> to vector<1x256xf32>
    %2 = vector.extract_strided_slice %0 {offsets = [1, 0], sizes = [1, 256], strides = [1, 1]} : vector<8x256xf32> to vector<1x256xf32>
    %3 = vector.extract_strided_slice %0 {offsets = [2, 0], sizes = [1, 256], strides = [1, 1]} : vector<8x256xf32> to vector<1x256xf32>
    %c0_1 = arith.constant 0 : index
    %c0_2 = arith.constant 0 : index
    %4 = vector.load %arg2[%c0_1, %c0_2] : memref<8x128xf32, #tpu.memory_space<vmem>>, vector<8x128xf32>
    %5 = tpu.transpose %4, [1, 0] : vector<8x128xf32> -> vector<128x8xf32>
    %6 = vector.extract_strided_slice %5 {offsets = [0, 0], sizes = [128, 1], strides = [1, 1]} : vector<128x8xf32> to vector<128x1xf32>
    %7 = vector.extract_strided_slice %5 {offsets = [0, 1], sizes = [128, 1], strides = [1, 1]} : vector<128x8xf32> to vector<128x1xf32>
    %8 = vector.extract_strided_slice %5 {offsets = [0, 2], sizes = [128, 1], strides = [1, 1]} : vector<128x8xf32> to vector<128x1xf32>
    %9 = vector.broadcast %1 : vector<1x256xf32> to vector<128x256xf32>
    %10 = vector.broadcast %6 : vector<128x1xf32> to vector<128x256xf32>
    %11 = arith.subf %9, %10 : vector<128x256xf32>
    %12 = vector.broadcast %2 : vector<1x256xf32> to vector<128x256xf32>
    %13 = vector.broadcast %7 : vector<128x1xf32> to vector<128x256xf32>
    %14 = arith.subf %12, %13 : vector<128x256xf32>
    %15 = vector.broadcast %3 : vector<1x256xf32> to vector<128x256xf32>
    %16 = vector.broadcast %8 : vector<128x1xf32> to vector<128x256xf32>
    %17 = arith.subf %15, %16 : vector<128x256xf32>
    %18 = arith.mulf %11, %11 : vector<128x256xf32>
    %19 = arith.mulf %14, %14 : vector<128x256xf32>
    %20 = arith.addf %18, %19 : vector<128x256xf32>
    %21 = arith.mulf %17, %17 : vector<128x256xf32>
    %22 = arith.addf %20, %21 : vector<128x256xf32>
    %cst = arith.constant 0.00999999977 : f32
    %23 = vector.broadcast %cst : f32 to vector<128x256xf32>
    %24 = arith.cmpf ole, %22, %23 : vector<128x256xf32>
    %25 = arith.extui %24 : vector<128x256xi1> to vector<128x256xi32>
    %26 = arith.sitofp %25 : vector<128x256xi32> to vector<128x256xf32>
    %c0_3 = arith.constant 0 : index
    %c0_4 = arith.constant 0 : index
    %27 = vector.load %arg3[%c0_3, %c0_4] : memref<256x16xf32, #tpu.memory_space<vmem>>, vector<256x16xf32>
    %cst_5 = arith.constant dense<0.000000e+00> : vector<128x16xf32>
    %28 = tpu.matmul %26, %27, %cst_5 {dimension_numbers = #tpu.dot_dimension_numbers<[1], [0], [0], [1], [0, 0, 1, 1], [], []>} : vector<128x256xf32>, vector<256x16xf32>, vector<128x16xf32> -> vector<128x16xf32>
    %29 = tpu.transpose %28, [1, 0] : vector<128x16xf32> -> vector<16x128xf32>
    %30 = vector.extract_strided_slice %29 {offsets = [0, 0], sizes = [1, 128], strides = [1, 1]} : vector<16x128xf32> to vector<1x128xf32>
    %31 = vector.extract_strided_slice %29 {offsets = [1, 0], sizes = [1, 128], strides = [1, 1]} : vector<16x128xf32> to vector<1x128xf32>
    %32 = vector.extract_strided_slice %29 {offsets = [2, 0], sizes = [1, 128], strides = [1, 1]} : vector<16x128xf32> to vector<1x128xf32>
    %33 = vector.extract_strided_slice %29 {offsets = [3, 0], sizes = [1, 128], strides = [1, 1]} : vector<16x128xf32> to vector<1x128xf32>
    %34 = vector.extract_strided_slice %29 {offsets = [4, 0], sizes = [1, 128], strides = [1, 1]} : vector<16x128xf32> to vector<1x128xf32>
    %35 = vector.extract_strided_slice %29 {offsets = [5, 0], sizes = [1, 128], strides = [1, 1]} : vector<16x128xf32> to vector<1x128xf32>
    %36 = vector.extract_strided_slice %29 {offsets = [6, 0], sizes = [1, 128], strides = [1, 1]} : vector<16x128xf32> to vector<1x128xf32>
    %37 = vector.extract_strided_slice %29 {offsets = [7, 0], sizes = [1, 128], strides = [1, 1]} : vector<16x128xf32> to vector<1x128xf32>
    %38 = vector.extract_strided_slice %29 {offsets = [8, 0], sizes = [1, 128], strides = [1, 1]} : vector<16x128xf32> to vector<1x128xf32>
    %39 = vector.extract_strided_slice %29 {offsets = [9, 0], sizes = [1, 128], strides = [1, 1]} : vector<16x128xf32> to vector<1x128xf32>
    %cst_6 = arith.constant 1.000000e+00 : f32
    %40 = vector.broadcast %cst_6 : f32 to vector<1x128xf32>
    %41 = arith.maximumf %30, %40 : vector<1x128xf32>
    %cst_7 = arith.constant 1.000000e+00 : f32
    %42 = vector.broadcast %cst_7 : f32 to vector<1x128xf32>
    %43 = arith.divf %42, %41 : vector<1x128xf32>
    %44 = arith.mulf %31, %43 : vector<1x128xf32>
    %45 = arith.mulf %32, %43 : vector<1x128xf32>
    %46 = arith.mulf %33, %43 : vector<1x128xf32>
    %47 = arith.mulf %34, %43 : vector<1x128xf32>
    %48 = arith.mulf %44, %44 : vector<1x128xf32>
    %49 = arith.subf %47, %48 : vector<1x128xf32>
    %50 = arith.mulf %35, %43 : vector<1x128xf32>
    %51 = arith.mulf %44, %45 : vector<1x128xf32>
    %52 = arith.subf %50, %51 : vector<1x128xf32>
    %53 = arith.mulf %36, %43 : vector<1x128xf32>
    %54 = arith.mulf %44, %46 : vector<1x128xf32>
    %55 = arith.subf %53, %54 : vector<1x128xf32>
    %56 = arith.mulf %37, %43 : vector<1x128xf32>
    %57 = arith.mulf %45, %45 : vector<1x128xf32>
    %58 = arith.subf %56, %57 : vector<1x128xf32>
    %59 = arith.mulf %38, %43 : vector<1x128xf32>
    %60 = arith.mulf %45, %46 : vector<1x128xf32>
    %61 = arith.subf %59, %60 : vector<1x128xf32>
    %62 = arith.mulf %39, %43 : vector<1x128xf32>
    %63 = arith.mulf %46, %46 : vector<1x128xf32>
    %64 = arith.subf %62, %63 : vector<1x128xf32>
    %65 = arith.addf %49, %58 : vector<1x128xf32>
    %66 = arith.addf %65, %64 : vector<1x128xf32>
    %cst_8 = arith.constant 9.99999996E-13 : f32
    %67 = vector.broadcast %cst_8 : f32 to vector<1x128xf32>
    %68 = arith.maximumf %66, %67 : vector<1x128xf32>
    %cst_9 = arith.constant 1.000000e+00 : f32
    %69 = vector.broadcast %cst_9 : f32 to vector<1x128xf32>
    %70 = arith.divf %69, %68 : vector<1x128xf32>
    %71 = arith.mulf %49, %70 : vector<1x128xf32>
    %72 = arith.mulf %52, %70 : vector<1x128xf32>
    %73 = arith.mulf %55, %70 : vector<1x128xf32>
    %74 = arith.mulf %58, %70 : vector<1x128xf32>
    %75 = arith.mulf %61, %70 : vector<1x128xf32>
    %76 = arith.mulf %64, %70 : vector<1x128xf32>
    %77 = arith.addf %71, %74 : vector<1x128xf32>
    %78 = arith.addf %77, %76 : vector<1x128xf32>
    %79 = arith.mulf %71, %74 : vector<1x128xf32>
    %80 = arith.mulf %72, %72 : vector<1x128xf32>
    %81 = arith.subf %79, %80 : vector<1x128xf32>
    %82 = arith.mulf %71, %76 : vector<1x128xf32>
    %83 = arith.mulf %73, %73 : vector<1x128xf32>
    %84 = arith.subf %82, %83 : vector<1x128xf32>
    %85 = arith.addf %81, %84 : vector<1x128xf32>
    %86 = arith.mulf %74, %76 : vector<1x128xf32>
    %87 = arith.mulf %75, %75 : vector<1x128xf32>
    %88 = arith.subf %86, %87 : vector<1x128xf32>
    %89 = arith.addf %85, %88 : vector<1x128xf32>
    %90 = arith.mulf %74, %76 : vector<1x128xf32>
    %91 = arith.mulf %75, %75 : vector<1x128xf32>
    %92 = arith.subf %90, %91 : vector<1x128xf32>
    %93 = arith.mulf %71, %92 : vector<1x128xf32>
    %94 = arith.mulf %72, %76 : vector<1x128xf32>
    %95 = arith.mulf %75, %73 : vector<1x128xf32>
    %96 = arith.subf %94, %95 : vector<1x128xf32>
    %97 = arith.mulf %72, %96 : vector<1x128xf32>
    %98 = arith.subf %93, %97 : vector<1x128xf32>
    %99 = arith.mulf %72, %75 : vector<1x128xf32>
    %100 = arith.mulf %74, %73 : vector<1x128xf32>
    %101 = arith.subf %99, %100 : vector<1x128xf32>
    %102 = arith.mulf %73, %101 : vector<1x128xf32>
    %103 = arith.addf %98, %102 : vector<1x128xf32>
    %cst_10 = arith.constant 0.000000e+00 : f32
    %104 = vector.broadcast %cst_10 : f32 to vector<1x128xf32>
    %105 = arith.subf %78, %104 : vector<1x128xf32>
    %106 = arith.mulf %105, %104 : vector<1x128xf32>
    %107 = arith.subf %106, %89 : vector<1x128xf32>
    %108 = arith.mulf %107, %104 : vector<1x128xf32>
    %109 = arith.addf %108, %103 : vector<1x128xf32>
    %cst_11 = arith.constant 2.000000e+00 : f32
    %110 = vector.broadcast %cst_11 : f32 to vector<1x128xf32>
    %111 = arith.mulf %110, %78 : vector<1x128xf32>
    %cst_12 = arith.constant 3.000000e+00 : f32
    %112 = vector.broadcast %cst_12 : f32 to vector<1x128xf32>
    %113 = arith.mulf %112, %104 : vector<1x128xf32>
    %114 = arith.subf %111, %113 : vector<1x128xf32>
    %115 = arith.mulf %114, %104 : vector<1x128xf32>
    %116 = arith.subf %115, %89 : vector<1x128xf32>
    %117 = math.absf %116 : vector<1x128xf32>
    %cst_13 = arith.constant 9.99999968E-21 : f32
    %118 = vector.broadcast %cst_13 : f32 to vector<1x128xf32>
    %119 = arith.cmpf ogt, %117, %118 : vector<1x128xf32>
    %cst_14 = arith.constant 1.000000e+00 : f32
    %120 = vector.broadcast %cst_14 : f32 to vector<1x128xf32>
    %121 = arith.select %119, %116, %120 : vector<1x128xi1>, vector<1x128xf32>
    %122 = arith.divf %109, %121 : vector<1x128xf32>
    %cst_15 = arith.constant 0.000000e+00 : f32
    %123 = vector.broadcast %cst_15 : f32 to vector<1x128xf32>
    %124 = arith.select %119, %122, %123 : vector<1x128xi1>, vector<1x128xf32>
    %125 = arith.subf %104, %124 : vector<1x128xf32>
    %126 = arith.subf %78, %125 : vector<1x128xf32>
    %127 = arith.mulf %126, %125 : vector<1x128xf32>
    %128 = arith.subf %127, %89 : vector<1x128xf32>
    %129 = arith.mulf %128, %125 : vector<1x128xf32>
    %130 = arith.addf %129, %103 : vector<1x128xf32>
    %cst_16 = arith.constant 2.000000e+00 : f32
    %131 = vector.broadcast %cst_16 : f32 to vector<1x128xf32>
    %132 = arith.mulf %131, %78 : vector<1x128xf32>
    %cst_17 = arith.constant 3.000000e+00 : f32
    %133 = vector.broadcast %cst_17 : f32 to vector<1x128xf32>
    %134 = arith.mulf %133, %125 : vector<1x128xf32>
    %135 = arith.subf %132, %134 : vector<1x128xf32>
    %136 = arith.mulf %135, %125 : vector<1x128xf32>
    %137 = arith.subf %136, %89 : vector<1x128xf32>
    %138 = math.absf %137 : vector<1x128xf32>
    %cst_18 = arith.constant 9.99999968E-21 : f32
    %139 = vector.broadcast %cst_18 : f32 to vector<1x128xf32>
    %140 = arith.cmpf ogt, %138, %139 : vector<1x128xf32>
    %cst_19 = arith.constant 1.000000e+00 : f32
    %141 = vector.broadcast %cst_19 : f32 to vector<1x128xf32>
    %142 = arith.select %140, %137, %141 : vector<1x128xi1>, vector<1x128xf32>
    %143 = arith.divf %130, %142 : vector<1x128xf32>
    %cst_20 = arith.constant 0.000000e+00 : f32
    %144 = vector.broadcast %cst_20 : f32 to vector<1x128xf32>
    %145 = arith.select %140, %143, %144 : vector<1x128xi1>, vector<1x128xf32>
    %146 = arith.subf %125, %145 : vector<1x128xf32>
    %147 = arith.subf %78, %146 : vector<1x128xf32>
    %148 = arith.mulf %147, %146 : vector<1x128xf32>
    %149 = arith.subf %148, %89 : vector<1x128xf32>
    %150 = arith.mulf %149, %146 : vector<1x128xf32>
    %151 = arith.addf %150, %103 : vector<1x128xf32>
    %cst_21 = arith.constant 2.000000e+00 : f32
    %152 = vector.broadcast %cst_21 : f32 to vector<1x128xf32>
    %153 = arith.mulf %152, %78 : vector<1x128xf32>
    %cst_22 = arith.constant 3.000000e+00 : f32
    %154 = vector.broadcast %cst_22 : f32 to vector<1x128xf32>
    %155 = arith.mulf %154, %146 : vector<1x128xf32>
    %156 = arith.subf %153, %155 : vector<1x128xf32>
    %157 = arith.mulf %156, %146 : vector<1x128xf32>
    %158 = arith.subf %157, %89 : vector<1x128xf32>
    %159 = math.absf %158 : vector<1x128xf32>
    %cst_23 = arith.constant 9.99999968E-21 : f32
    %160 = vector.broadcast %cst_23 : f32 to vector<1x128xf32>
    %161 = arith.cmpf ogt, %159, %160 : vector<1x128xf32>
    %cst_24 = arith.constant 1.000000e+00 : f32
    %162 = vector.broadcast %cst_24 : f32 to vector<1x128xf32>
    %163 = arith.select %161, %158, %162 : vector<1x128xi1>, vector<1x128xf32>
    %164 = arith.divf %151, %163 : vector<1x128xf32>
    %cst_25 = arith.constant 0.000000e+00 : f32
    %165 = vector.broadcast %cst_25 : f32 to vector<1x128xf32>
    %166 = arith.select %161, %164, %165 : vector<1x128xi1>, vector<1x128xf32>
    %167 = arith.subf %146, %166 : vector<1x128xf32>
    %168 = arith.subf %78, %167 : vector<1x128xf32>
    %169 = arith.mulf %168, %167 : vector<1x128xf32>
    %170 = arith.subf %169, %89 : vector<1x128xf32>
    %171 = arith.mulf %170, %167 : vector<1x128xf32>
    %172 = arith.addf %171, %103 : vector<1x128xf32>
    %cst_26 = arith.constant 2.000000e+00 : f32
    %173 = vector.broadcast %cst_26 : f32 to vector<1x128xf32>
    %174 = arith.mulf %173, %78 : vector<1x128xf32>
    %cst_27 = arith.constant 3.000000e+00 : f32
    %175 = vector.broadcast %cst_27 : f32 to vector<1x128xf32>
    %176 = arith.mulf %175, %167 : vector<1x128xf32>
    %177 = arith.subf %174, %176 : vector<1x128xf32>
    %178 = arith.mulf %177, %167 : vector<1x128xf32>
    %179 = arith.subf %178, %89 : vector<1x128xf32>
    %180 = math.absf %179 : vector<1x128xf32>
    %cst_28 = arith.constant 9.99999968E-21 : f32
    %181 = vector.broadcast %cst_28 : f32 to vector<1x128xf32>
    %182 = arith.cmpf ogt, %180, %181 : vector<1x128xf32>
    %cst_29 = arith.constant 1.000000e+00 : f32
    %183 = vector.broadcast %cst_29 : f32 to vector<1x128xf32>
    %184 = arith.select %182, %179, %183 : vector<1x128xi1>, vector<1x128xf32>
    %185 = arith.divf %172, %184 : vector<1x128xf32>
    %cst_30 = arith.constant 0.000000e+00 : f32
    %186 = vector.broadcast %cst_30 : f32 to vector<1x128xf32>
    %187 = arith.select %182, %185, %186 : vector<1x128xi1>, vector<1x128xf32>
    %188 = arith.subf %167, %187 : vector<1x128xf32>
    %189 = arith.subf %78, %188 : vector<1x128xf32>
    %190 = arith.mulf %189, %188 : vector<1x128xf32>
    %191 = arith.subf %190, %89 : vector<1x128xf32>
    %192 = arith.mulf %191, %188 : vector<1x128xf32>
    %193 = arith.addf %192, %103 : vector<1x128xf32>
    %cst_31 = arith.constant 2.000000e+00 : f32
    %194 = vector.broadcast %cst_31 : f32 to vector<1x128xf32>
    %195 = arith.mulf %194, %78 : vector<1x128xf32>
    %cst_32 = arith.constant 3.000000e+00 : f32
    %196 = vector.broadcast %cst_32 : f32 to vector<1x128xf32>
    %197 = arith.mulf %196, %188 : vector<1x128xf32>
    %198 = arith.subf %195, %197 : vector<1x128xf32>
    %199 = arith.mulf %198, %188 : vector<1x128xf32>
    %200 = arith.subf %199, %89 : vector<1x128xf32>
    %201 = math.absf %200 : vector<1x128xf32>
    %cst_33 = arith.constant 9.99999968E-21 : f32
    %202 = vector.broadcast %cst_33 : f32 to vector<1x128xf32>
    %203 = arith.cmpf ogt, %201, %202 : vector<1x128xf32>
    %cst_34 = arith.constant 1.000000e+00 : f32
    %204 = vector.broadcast %cst_34 : f32 to vector<1x128xf32>
    %205 = arith.select %203, %200, %204 : vector<1x128xi1>, vector<1x128xf32>
    %206 = arith.divf %193, %205 : vector<1x128xf32>
    %cst_35 = arith.constant 0.000000e+00 : f32
    %207 = vector.broadcast %cst_35 : f32 to vector<1x128xf32>
    %208 = arith.select %203, %206, %207 : vector<1x128xi1>, vector<1x128xf32>
    %209 = arith.subf %188, %208 : vector<1x128xf32>
    %210 = arith.subf %78, %209 : vector<1x128xf32>
    %211 = arith.mulf %210, %209 : vector<1x128xf32>
    %212 = arith.subf %211, %89 : vector<1x128xf32>
    %213 = arith.mulf %212, %209 : vector<1x128xf32>
    %214 = arith.addf %213, %103 : vector<1x128xf32>
    %cst_36 = arith.constant 2.000000e+00 : f32
    %215 = vector.broadcast %cst_36 : f32 to vector<1x128xf32>
    %216 = arith.mulf %215, %78 : vector<1x128xf32>
    %cst_37 = arith.constant 3.000000e+00 : f32
    %217 = vector.broadcast %cst_37 : f32 to vector<1x128xf32>
    %218 = arith.mulf %217, %209 : vector<1x128xf32>
    %219 = arith.subf %216, %218 : vector<1x128xf32>
    %220 = arith.mulf %219, %209 : vector<1x128xf32>
    %221 = arith.subf %220, %89 : vector<1x128xf32>
    %222 = math.absf %221 : vector<1x128xf32>
    %cst_38 = arith.constant 9.99999968E-21 : f32
    %223 = vector.broadcast %cst_38 : f32 to vector<1x128xf32>
    %224 = arith.cmpf ogt, %222, %223 : vector<1x128xf32>
    %cst_39 = arith.constant 1.000000e+00 : f32
    %225 = vector.broadcast %cst_39 : f32 to vector<1x128xf32>
    %226 = arith.select %224, %221, %225 : vector<1x128xi1>, vector<1x128xf32>
    %227 = arith.divf %214, %226 : vector<1x128xf32>
    %cst_40 = arith.constant 0.000000e+00 : f32
    %228 = vector.broadcast %cst_40 : f32 to vector<1x128xf32>
    %229 = arith.select %224, %227, %228 : vector<1x128xi1>, vector<1x128xf32>
    %230 = arith.subf %209, %229 : vector<1x128xf32>
    %231 = arith.subf %78, %230 : vector<1x128xf32>
    %232 = arith.mulf %231, %230 : vector<1x128xf32>
    %233 = arith.subf %232, %89 : vector<1x128xf32>
    %234 = arith.mulf %233, %230 : vector<1x128xf32>
    %235 = arith.addf %234, %103 : vector<1x128xf32>
    %cst_41 = arith.constant 2.000000e+00 : f32
    %236 = vector.broadcast %cst_41 : f32 to vector<1x128xf32>
    %237 = arith.mulf %236, %78 : vector<1x128xf32>
    %cst_42 = arith.constant 3.000000e+00 : f32
    %238 = vector.broadcast %cst_42 : f32 to vector<1x128xf32>
    %239 = arith.mulf %238, %230 : vector<1x128xf32>
    %240 = arith.subf %237, %239 : vector<1x128xf32>
    %241 = arith.mulf %240, %230 : vector<1x128xf32>
    %242 = arith.subf %241, %89 : vector<1x128xf32>
    %243 = math.absf %242 : vector<1x128xf32>
    %cst_43 = arith.constant 9.99999968E-21 : f32
    %244 = vector.broadcast %cst_43 : f32 to vector<1x128xf32>
    %245 = arith.cmpf ogt, %243, %244 : vector<1x128xf32>
    %cst_44 = arith.constant 1.000000e+00 : f32
    %246 = vector.broadcast %cst_44 : f32 to vector<1x128xf32>
    %247 = arith.select %245, %242, %246 : vector<1x128xi1>, vector<1x128xf32>
    %248 = arith.divf %235, %247 : vector<1x128xf32>
    %cst_45 = arith.constant 0.000000e+00 : f32
    %249 = vector.broadcast %cst_45 : f32 to vector<1x128xf32>
    %250 = arith.select %245, %248, %249 : vector<1x128xi1>, vector<1x128xf32>
    %251 = arith.subf %230, %250 : vector<1x128xf32>
    %252 = arith.subf %78, %251 : vector<1x128xf32>
    %253 = arith.mulf %252, %251 : vector<1x128xf32>
    %254 = arith.subf %253, %89 : vector<1x128xf32>
    %255 = arith.mulf %254, %251 : vector<1x128xf32>
    %256 = arith.addf %255, %103 : vector<1x128xf32>
    %cst_46 = arith.constant 2.000000e+00 : f32
    %257 = vector.broadcast %cst_46 : f32 to vector<1x128xf32>
    %258 = arith.mulf %257, %78 : vector<1x128xf32>
    %cst_47 = arith.constant 3.000000e+00 : f32
    %259 = vector.broadcast %cst_47 : f32 to vector<1x128xf32>
    %260 = arith.mulf %259, %251 : vector<1x128xf32>
    %261 = arith.subf %258, %260 : vector<1x128xf32>
    %262 = arith.mulf %261, %251 : vector<1x128xf32>
    %263 = arith.subf %262, %89 : vector<1x128xf32>
    %264 = math.absf %263 : vector<1x128xf32>
    %cst_48 = arith.constant 9.99999968E-21 : f32
    %265 = vector.broadcast %cst_48 : f32 to vector<1x128xf32>
    %266 = arith.cmpf ogt, %264, %265 : vector<1x128xf32>
    %cst_49 = arith.constant 1.000000e+00 : f32
    %267 = vector.broadcast %cst_49 : f32 to vector<1x128xf32>
    %268 = arith.select %266, %263, %267 : vector<1x128xi1>, vector<1x128xf32>
    %269 = arith.divf %256, %268 : vector<1x128xf32>
    %cst_50 = arith.constant 0.000000e+00 : f32
    %270 = vector.broadcast %cst_50 : f32 to vector<1x128xf32>
    %271 = arith.select %266, %269, %270 : vector<1x128xi1>, vector<1x128xf32>
    %272 = arith.subf %251, %271 : vector<1x128xf32>
    %273 = arith.subf %78, %272 : vector<1x128xf32>
    %274 = arith.mulf %273, %272 : vector<1x128xf32>
    %275 = arith.subf %274, %89 : vector<1x128xf32>
    %276 = arith.mulf %275, %272 : vector<1x128xf32>
    %277 = arith.addf %276, %103 : vector<1x128xf32>
    %cst_51 = arith.constant 2.000000e+00 : f32
    %278 = vector.broadcast %cst_51 : f32 to vector<1x128xf32>
    %279 = arith.mulf %278, %78 : vector<1x128xf32>
    %cst_52 = arith.constant 3.000000e+00 : f32
    %280 = vector.broadcast %cst_52 : f32 to vector<1x128xf32>
    %281 = arith.mulf %280, %272 : vector<1x128xf32>
    %282 = arith.subf %279, %281 : vector<1x128xf32>
    %283 = arith.mulf %282, %272 : vector<1x128xf32>
    %284 = arith.subf %283, %89 : vector<1x128xf32>
    %285 = math.absf %284 : vector<1x128xf32>
    %cst_53 = arith.constant 9.99999968E-21 : f32
    %286 = vector.broadcast %cst_53 : f32 to vector<1x128xf32>
    %287 = arith.cmpf ogt, %285, %286 : vector<1x128xf32>
    %cst_54 = arith.constant 1.000000e+00 : f32
    %288 = vector.broadcast %cst_54 : f32 to vector<1x128xf32>
    %289 = arith.select %287, %284, %288 : vector<1x128xi1>, vector<1x128xf32>
    %290 = arith.divf %277, %289 : vector<1x128xf32>
    %cst_55 = arith.constant 0.000000e+00 : f32
    %291 = vector.broadcast %cst_55 : f32 to vector<1x128xf32>
    %292 = arith.select %287, %290, %291 : vector<1x128xi1>, vector<1x128xf32>
    %293 = arith.subf %272, %292 : vector<1x128xf32>
    %294 = arith.subf %78, %293 : vector<1x128xf32>
    %295 = arith.mulf %294, %293 : vector<1x128xf32>
    %296 = arith.subf %295, %89 : vector<1x128xf32>
    %297 = arith.mulf %296, %293 : vector<1x128xf32>
    %298 = arith.addf %297, %103 : vector<1x128xf32>
    %cst_56 = arith.constant 2.000000e+00 : f32
    %299 = vector.broadcast %cst_56 : f32 to vector<1x128xf32>
    %300 = arith.mulf %299, %78 : vector<1x128xf32>
    %cst_57 = arith.constant 3.000000e+00 : f32
    %301 = vector.broadcast %cst_57 : f32 to vector<1x128xf32>
    %302 = arith.mulf %301, %293 : vector<1x128xf32>
    %303 = arith.subf %300, %302 : vector<1x128xf32>
    %304 = arith.mulf %303, %293 : vector<1x128xf32>
    %305 = arith.subf %304, %89 : vector<1x128xf32>
    %306 = math.absf %305 : vector<1x128xf32>
    %cst_58 = arith.constant 9.99999968E-21 : f32
    %307 = vector.broadcast %cst_58 : f32 to vector<1x128xf32>
    %308 = arith.cmpf ogt, %306, %307 : vector<1x128xf32>
    %cst_59 = arith.constant 1.000000e+00 : f32
    %309 = vector.broadcast %cst_59 : f32 to vector<1x128xf32>
    %310 = arith.select %308, %305, %309 : vector<1x128xi1>, vector<1x128xf32>
    %311 = arith.divf %298, %310 : vector<1x128xf32>
    %cst_60 = arith.constant 0.000000e+00 : f32
    %312 = vector.broadcast %cst_60 : f32 to vector<1x128xf32>
    %313 = arith.select %308, %311, %312 : vector<1x128xi1>, vector<1x128xf32>
    %314 = arith.subf %293, %313 : vector<1x128xf32>
    %315 = arith.subf %78, %314 : vector<1x128xf32>
    %316 = arith.mulf %315, %314 : vector<1x128xf32>
    %317 = arith.subf %316, %89 : vector<1x128xf32>
    %318 = arith.mulf %317, %314 : vector<1x128xf32>
    %319 = arith.addf %318, %103 : vector<1x128xf32>
    %cst_61 = arith.constant 2.000000e+00 : f32
    %320 = vector.broadcast %cst_61 : f32 to vector<1x128xf32>
    %321 = arith.mulf %320, %78 : vector<1x128xf32>
    %cst_62 = arith.constant 3.000000e+00 : f32
    %322 = vector.broadcast %cst_62 : f32 to vector<1x128xf32>
    %323 = arith.mulf %322, %314 : vector<1x128xf32>
    %324 = arith.subf %321, %323 : vector<1x128xf32>
    %325 = arith.mulf %324, %314 : vector<1x128xf32>
    %326 = arith.subf %325, %89 : vector<1x128xf32>
    %327 = math.absf %326 : vector<1x128xf32>
    %cst_63 = arith.constant 9.99999968E-21 : f32
    %328 = vector.broadcast %cst_63 : f32 to vector<1x128xf32>
    %329 = arith.cmpf ogt, %327, %328 : vector<1x128xf32>
    %cst_64 = arith.constant 1.000000e+00 : f32
    %330 = vector.broadcast %cst_64 : f32 to vector<1x128xf32>
    %331 = arith.select %329, %326, %330 : vector<1x128xi1>, vector<1x128xf32>
    %332 = arith.divf %319, %331 : vector<1x128xf32>
    %cst_65 = arith.constant 0.000000e+00 : f32
    %333 = vector.broadcast %cst_65 : f32 to vector<1x128xf32>
    %334 = arith.select %329, %332, %333 : vector<1x128xi1>, vector<1x128xf32>
    %335 = arith.subf %314, %334 : vector<1x128xf32>
    %336 = arith.subf %78, %335 : vector<1x128xf32>
    %337 = arith.mulf %336, %335 : vector<1x128xf32>
    %338 = arith.subf %337, %89 : vector<1x128xf32>
    %339 = arith.mulf %338, %335 : vector<1x128xf32>
    %340 = arith.addf %339, %103 : vector<1x128xf32>
    %cst_66 = arith.constant 2.000000e+00 : f32
    %341 = vector.broadcast %cst_66 : f32 to vector<1x128xf32>
    %342 = arith.mulf %341, %78 : vector<1x128xf32>
    %cst_67 = arith.constant 3.000000e+00 : f32
    %343 = vector.broadcast %cst_67 : f32 to vector<1x128xf32>
    %344 = arith.mulf %343, %335 : vector<1x128xf32>
    %345 = arith.subf %342, %344 : vector<1x128xf32>
    %346 = arith.mulf %345, %335 : vector<1x128xf32>
    %347 = arith.subf %346, %89 : vector<1x128xf32>
    %348 = math.absf %347 : vector<1x128xf32>
    %cst_68 = arith.constant 9.99999968E-21 : f32
    %349 = vector.broadcast %cst_68 : f32 to vector<1x128xf32>
    %350 = arith.cmpf ogt, %348, %349 : vector<1x128xf32>
    %cst_69 = arith.constant 1.000000e+00 : f32
    %351 = vector.broadcast %cst_69 : f32 to vector<1x128xf32>
    %352 = arith.select %350, %347, %351 : vector<1x128xi1>, vector<1x128xf32>
    %353 = arith.divf %340, %352 : vector<1x128xf32>
    %cst_70 = arith.constant 0.000000e+00 : f32
    %354 = vector.broadcast %cst_70 : f32 to vector<1x128xf32>
    %355 = arith.select %350, %353, %354 : vector<1x128xi1>, vector<1x128xf32>
    %356 = arith.subf %335, %355 : vector<1x128xf32>
    %357 = arith.subf %78, %356 : vector<1x128xf32>
    %358 = arith.mulf %357, %356 : vector<1x128xf32>
    %359 = arith.subf %358, %89 : vector<1x128xf32>
    %360 = arith.mulf %359, %356 : vector<1x128xf32>
    %361 = arith.addf %360, %103 : vector<1x128xf32>
    %cst_71 = arith.constant 2.000000e+00 : f32
    %362 = vector.broadcast %cst_71 : f32 to vector<1x128xf32>
    %363 = arith.mulf %362, %78 : vector<1x128xf32>
    %cst_72 = arith.constant 3.000000e+00 : f32
    %364 = vector.broadcast %cst_72 : f32 to vector<1x128xf32>
    %365 = arith.mulf %364, %356 : vector<1x128xf32>
    %366 = arith.subf %363, %365 : vector<1x128xf32>
    %367 = arith.mulf %366, %356 : vector<1x128xf32>
    %368 = arith.subf %367, %89 : vector<1x128xf32>
    %369 = math.absf %368 : vector<1x128xf32>
    %cst_73 = arith.constant 9.99999968E-21 : f32
    %370 = vector.broadcast %cst_73 : f32 to vector<1x128xf32>
    %371 = arith.cmpf ogt, %369, %370 : vector<1x128xf32>
    %cst_74 = arith.constant 1.000000e+00 : f32
    %372 = vector.broadcast %cst_74 : f32 to vector<1x128xf32>
    %373 = arith.select %371, %368, %372 : vector<1x128xi1>, vector<1x128xf32>
    %374 = arith.divf %361, %373 : vector<1x128xf32>
    %cst_75 = arith.constant 0.000000e+00 : f32
    %375 = vector.broadcast %cst_75 : f32 to vector<1x128xf32>
    %376 = arith.select %371, %374, %375 : vector<1x128xi1>, vector<1x128xf32>
    %377 = arith.subf %356, %376 : vector<1x128xf32>
    %378 = arith.subf %78, %377 : vector<1x128xf32>
    %379 = arith.mulf %378, %377 : vector<1x128xf32>
    %380 = arith.subf %379, %89 : vector<1x128xf32>
    %381 = arith.mulf %380, %377 : vector<1x128xf32>
    %382 = arith.addf %381, %103 : vector<1x128xf32>
    %cst_76 = arith.constant 2.000000e+00 : f32
    %383 = vector.broadcast %cst_76 : f32 to vector<1x128xf32>
    %384 = arith.mulf %383, %78 : vector<1x128xf32>
    %cst_77 = arith.constant 3.000000e+00 : f32
    %385 = vector.broadcast %cst_77 : f32 to vector<1x128xf32>
    %386 = arith.mulf %385, %377 : vector<1x128xf32>
    %387 = arith.subf %384, %386 : vector<1x128xf32>
    %388 = arith.mulf %387, %377 : vector<1x128xf32>
    %389 = arith.subf %388, %89 : vector<1x128xf32>
    %390 = math.absf %389 : vector<1x128xf32>
    %cst_78 = arith.constant 9.99999968E-21 : f32
    %391 = vector.broadcast %cst_78 : f32 to vector<1x128xf32>
    %392 = arith.cmpf ogt, %390, %391 : vector<1x128xf32>
    %cst_79 = arith.constant 1.000000e+00 : f32
    %393 = vector.broadcast %cst_79 : f32 to vector<1x128xf32>
    %394 = arith.select %392, %389, %393 : vector<1x128xi1>, vector<1x128xf32>
    %395 = arith.divf %382, %394 : vector<1x128xf32>
    %cst_80 = arith.constant 0.000000e+00 : f32
    %396 = vector.broadcast %cst_80 : f32 to vector<1x128xf32>
    %397 = arith.select %392, %395, %396 : vector<1x128xi1>, vector<1x128xf32>
    %398 = arith.subf %377, %397 : vector<1x128xf32>
    %399 = arith.subf %78, %398 : vector<1x128xf32>
    %400 = arith.mulf %399, %398 : vector<1x128xf32>
    %401 = arith.subf %400, %89 : vector<1x128xf32>
    %402 = arith.mulf %401, %398 : vector<1x128xf32>
    %403 = arith.addf %402, %103 : vector<1x128xf32>
    %cst_81 = arith.constant 2.000000e+00 : f32
    %404 = vector.broadcast %cst_81 : f32 to vector<1x128xf32>
    %405 = arith.mulf %404, %78 : vector<1x128xf32>
    %cst_82 = arith.constant 3.000000e+00 : f32
    %406 = vector.broadcast %cst_82 : f32 to vector<1x128xf32>
    %407 = arith.mulf %406, %398 : vector<1x128xf32>
    %408 = arith.subf %405, %407 : vector<1x128xf32>
    %409 = arith.mulf %408, %398 : vector<1x128xf32>
    %410 = arith.subf %409, %89 : vector<1x128xf32>
    %411 = math.absf %410 : vector<1x128xf32>
    %cst_83 = arith.constant 9.99999968E-21 : f32
    %412 = vector.broadcast %cst_83 : f32 to vector<1x128xf32>
    %413 = arith.cmpf ogt, %411, %412 : vector<1x128xf32>
    %cst_84 = arith.constant 1.000000e+00 : f32
    %414 = vector.broadcast %cst_84 : f32 to vector<1x128xf32>
    %415 = arith.select %413, %410, %414 : vector<1x128xi1>, vector<1x128xf32>
    %416 = arith.divf %403, %415 : vector<1x128xf32>
    %cst_85 = arith.constant 0.000000e+00 : f32
    %417 = vector.broadcast %cst_85 : f32 to vector<1x128xf32>
    %418 = arith.select %413, %416, %417 : vector<1x128xi1>, vector<1x128xf32>
    %419 = arith.subf %398, %418 : vector<1x128xf32>
    %420 = arith.subf %78, %419 : vector<1x128xf32>
    %421 = arith.mulf %420, %419 : vector<1x128xf32>
    %422 = arith.subf %421, %89 : vector<1x128xf32>
    %423 = arith.mulf %422, %419 : vector<1x128xf32>
    %424 = arith.addf %423, %103 : vector<1x128xf32>
    %cst_86 = arith.constant 2.000000e+00 : f32
    %425 = vector.broadcast %cst_86 : f32 to vector<1x128xf32>
    %426 = arith.mulf %425, %78 : vector<1x128xf32>
    %cst_87 = arith.constant 3.000000e+00 : f32
    %427 = vector.broadcast %cst_87 : f32 to vector<1x128xf32>
    %428 = arith.mulf %427, %419 : vector<1x128xf32>
    %429 = arith.subf %426, %428 : vector<1x128xf32>
    %430 = arith.mulf %429, %419 : vector<1x128xf32>
    %431 = arith.subf %430, %89 : vector<1x128xf32>
    %432 = math.absf %431 : vector<1x128xf32>
    %cst_88 = arith.constant 9.99999968E-21 : f32
    %433 = vector.broadcast %cst_88 : f32 to vector<1x128xf32>
    %434 = arith.cmpf ogt, %432, %433 : vector<1x128xf32>
    %cst_89 = arith.constant 1.000000e+00 : f32
    %435 = vector.broadcast %cst_89 : f32 to vector<1x128xf32>
    %436 = arith.select %434, %431, %435 : vector<1x128xi1>, vector<1x128xf32>
    %437 = arith.divf %424, %436 : vector<1x128xf32>
    %cst_90 = arith.constant 0.000000e+00 : f32
    %438 = vector.broadcast %cst_90 : f32 to vector<1x128xf32>
    %439 = arith.select %434, %437, %438 : vector<1x128xi1>, vector<1x128xf32>
    %440 = arith.subf %419, %439 : vector<1x128xf32>
    %441 = arith.subf %71, %440 : vector<1x128xf32>
    %442 = arith.subf %74, %440 : vector<1x128xf32>
    %443 = arith.subf %76, %440 : vector<1x128xf32>
    %444 = arith.mulf %72, %75 : vector<1x128xf32>
    %445 = arith.mulf %73, %442 : vector<1x128xf32>
    %446 = arith.subf %444, %445 : vector<1x128xf32>
    %447 = arith.mulf %73, %72 : vector<1x128xf32>
    %448 = arith.mulf %441, %75 : vector<1x128xf32>
    %449 = arith.subf %447, %448 : vector<1x128xf32>
    %450 = arith.mulf %441, %442 : vector<1x128xf32>
    %451 = arith.mulf %72, %72 : vector<1x128xf32>
    %452 = arith.subf %450, %451 : vector<1x128xf32>
    %453 = arith.mulf %72, %443 : vector<1x128xf32>
    %454 = arith.mulf %73, %75 : vector<1x128xf32>
    %455 = arith.subf %453, %454 : vector<1x128xf32>
    %456 = arith.mulf %73, %73 : vector<1x128xf32>
    %457 = arith.mulf %441, %443 : vector<1x128xf32>
    %458 = arith.subf %456, %457 : vector<1x128xf32>
    %459 = arith.mulf %441, %75 : vector<1x128xf32>
    %460 = arith.mulf %72, %73 : vector<1x128xf32>
    %461 = arith.subf %459, %460 : vector<1x128xf32>
    %462 = arith.mulf %442, %443 : vector<1x128xf32>
    %463 = arith.mulf %75, %75 : vector<1x128xf32>
    %464 = arith.subf %462, %463 : vector<1x128xf32>
    %465 = arith.mulf %75, %73 : vector<1x128xf32>
    %466 = arith.mulf %72, %443 : vector<1x128xf32>
    %467 = arith.subf %465, %466 : vector<1x128xf32>
    %468 = arith.mulf %72, %75 : vector<1x128xf32>
    %469 = arith.mulf %442, %73 : vector<1x128xf32>
    %470 = arith.subf %468, %469 : vector<1x128xf32>
    %471 = arith.mulf %446, %446 : vector<1x128xf32>
    %472 = arith.mulf %449, %449 : vector<1x128xf32>
    %473 = arith.addf %471, %472 : vector<1x128xf32>
    %474 = arith.mulf %452, %452 : vector<1x128xf32>
    %475 = arith.addf %473, %474 : vector<1x128xf32>
    %476 = arith.mulf %455, %455 : vector<1x128xf32>
    %477 = arith.mulf %458, %458 : vector<1x128xf32>
    %478 = arith.addf %476, %477 : vector<1x128xf32>
    %479 = arith.mulf %461, %461 : vector<1x128xf32>
    %480 = arith.addf %478, %479 : vector<1x128xf32>
    %481 = arith.mulf %464, %464 : vector<1x128xf32>
    %482 = arith.mulf %467, %467 : vector<1x128xf32>
    %483 = arith.addf %481, %482 : vector<1x128xf32>
    %484 = arith.mulf %470, %470 : vector<1x128xf32>
    %485 = arith.addf %483, %484 : vector<1x128xf32>
    %486 = arith.cmpf ogt, %480, %475 : vector<1x128xf32>
    %487 = arith.select %486, %455, %446 : vector<1x128xi1>, vector<1x128xf32>
    %488 = arith.select %486, %458, %449 : vector<1x128xi1>, vector<1x128xf32>
    %489 = arith.select %486, %461, %452 : vector<1x128xi1>, vector<1x128xf32>
    %490 = arith.select %486, %480, %475 : vector<1x128xi1>, vector<1x128xf32>
    %491 = arith.cmpf ogt, %485, %490 : vector<1x128xf32>
    %492 = arith.select %491, %464, %487 : vector<1x128xi1>, vector<1x128xf32>
    %493 = arith.select %491, %467, %488 : vector<1x128xi1>, vector<1x128xf32>
    %494 = arith.select %491, %470, %489 : vector<1x128xi1>, vector<1x128xf32>
    %495 = arith.select %491, %485, %490 : vector<1x128xi1>, vector<1x128xf32>
    %cst_91 = arith.constant 9.99999968E-21 : f32
    %496 = vector.broadcast %cst_91 : f32 to vector<1x128xf32>
    %497 = arith.cmpf olt, %495, %496 : vector<1x128xf32>
    %cst_92 = arith.constant 1.000000e-30 : f32
    %498 = vector.broadcast %cst_92 : f32 to vector<1x128xf32>
    %499 = arith.maximumf %495, %498 : vector<1x128xf32>
    %500 = math.rsqrt %499 : vector<1x128xf32>
    %501 = arith.mulf %492, %500 : vector<1x128xf32>
    %cst_93 = arith.constant 0.000000e+00 : f32
    %502 = vector.broadcast %cst_93 : f32 to vector<1x128xf32>
    %503 = arith.select %497, %502, %501 : vector<1x128xi1>, vector<1x128xf32>
    %504 = arith.mulf %493, %500 : vector<1x128xf32>
    %cst_94 = arith.constant 0.000000e+00 : f32
    %505 = vector.broadcast %cst_94 : f32 to vector<1x128xf32>
    %506 = arith.select %497, %505, %504 : vector<1x128xi1>, vector<1x128xf32>
    %507 = arith.mulf %494, %500 : vector<1x128xf32>
    %cst_95 = arith.constant 1.000000e+00 : f32
    %508 = vector.broadcast %cst_95 : f32 to vector<1x128xf32>
    %509 = arith.select %497, %508, %507 : vector<1x128xi1>, vector<1x128xf32>
    %510 = tpu.iota {dimensions = array<i32: 0>} : vector<8x128xi32>
    %c0_i32 = arith.constant 0 : i32
    %511 = vector.broadcast %c0_i32 : i32 to vector<8x128xi32>
    %512 = arith.cmpi eq, %510, %511 : vector<8x128xi32>
    %513 = arith.extui %512 : vector<8x128xi1> to vector<8x128xi32>
    %514 = arith.sitofp %513 : vector<8x128xi32> to vector<8x128xf32>
    %515 = vector.broadcast %503 : vector<1x128xf32> to vector<8x128xf32>
    %516 = arith.mulf %515, %514 : vector<8x128xf32>
    %c1_i32 = arith.constant 1 : i32
    %517 = vector.broadcast %c1_i32 : i32 to vector<8x128xi32>
    %518 = arith.cmpi eq, %510, %517 : vector<8x128xi32>
    %519 = arith.extui %518 : vector<8x128xi1> to vector<8x128xi32>
    %520 = arith.sitofp %519 : vector<8x128xi32> to vector<8x128xf32>
    %521 = vector.broadcast %506 : vector<1x128xf32> to vector<8x128xf32>
    %522 = arith.mulf %521, %520 : vector<8x128xf32>
    %523 = arith.addf %516, %522 : vector<8x128xf32>
    %c2_i32 = arith.constant 2 : i32
    %524 = vector.broadcast %c2_i32 : i32 to vector<8x128xi32>
    %525 = arith.cmpi eq, %510, %524 : vector<8x128xi32>
    %526 = arith.extui %525 : vector<8x128xi1> to vector<8x128xi32>
    %527 = arith.sitofp %526 : vector<8x128xi32> to vector<8x128xf32>
    %528 = vector.broadcast %509 : vector<1x128xf32> to vector<8x128xf32>
    %529 = arith.mulf %528, %527 : vector<8x128xf32>
    %530 = arith.addf %523, %529 : vector<8x128xf32>
    %c0_96 = arith.constant 0 : index
    %c0_97 = arith.constant 0 : index
    %531 = vector.load %arg4[%c0_96, %c0_97] : memref<8x128xf32, #tpu.memory_space<vmem>>, vector<8x128xf32>
    tpu.vector_store %arg4[%c0_96, %c0_97], %530 {strides = array<i32>} : memref<8x128xf32, #tpu.memory_space<vmem>>, vector<8x128xf32>,
    return
  }
  func.func @transform_0(%arg0: i32) -> (i32, i32) {
    %c0_i32 = arith.constant 0 : i32
    %c0_i32_0 = arith.constant 0 : i32
    %c0_i32_1 = arith.constant 0 : i32
    return %c0_i32, %c0_i32_0 : i32, i32
  }
  func.func @transform_1(%arg0: i32) -> (i32, i32) {
    %c0_i32 = arith.constant 0 : i32
    %c0_i32_0 = arith.constant 0 : i32
    return %c0_i32, %arg0 : i32, i32
  }
  func.func @transform_2(%arg0: i32) -> (i32, i32) {
    %c0_i32 = arith.constant 0 : i32
    %c0_i32_0 = arith.constant 0 : i32
    %c0_i32_1 = arith.constant 0 : i32
    return %c0_i32, %c0_i32_0 : i32, i32
  }
  func.func @transform_3(%arg0: i32) -> (i32, i32) {
    %c0_i32 = arith.constant 0 : i32
    %c0_i32_0 = arith.constant 0 : i32
    return %c0_i32, %arg0 : i32, i32
  }
}

</mosaic_0001>

<llo_original>
// kernel: tpu_custom_call.1
$region0: #{tpu_custom_call.1}
  #allocation0 [shape = 'u32[]', space=smem, size = 0x4, offset = 0x4, fixed_abs, tag = 'smem constant byte address 0x4 - core index']
  #allocation1 [shape = 'u32[72,128]{1,0:T(1,128)}', space=vmem, size = 0x9000, scoped, tag = 'internal scratch']
  %s0 = inlined_call_operand.vmem [shape: f32[8,256], index: 0, kind: input, shape index: {}]
  %s1 = inlined_call_operand.vmem [shape: f32[8,256], index: 1, kind: input, shape index: {}]
  %s2 = inlined_call_operand.vmem [shape: f32[256,16], index: 2, kind: input, shape index: {}]
  %s3 = inlined_call_operand.hbm [shape: f32[8,256], index: 3, kind: output, shape index: {}]
  %s4 = sld [smem:[#allocation0]]
  $region45: #{tpu_custom_call.1} parent=0
    _
  %s6 = ssub.s32 1, %s4
  %s7 = scalar_select 0, %s6, %s4
  $region1: #{tpu_custom_call.1} parent=0
    #allocation2 [shape = 'u8[8192]{0}', space=vmem, size = 0x2000, scoped, tag = 'output window, operand 0']
    #allocation3 [shape = 's32[2]{0}', space=sflag, size = 0x8, scoped, tag = 'scoped memory for tpu_custom_call.1']
    %8 = vsyncpa [#allocation3], 0
    %s9 = scalar_lea.sflag [#allocation3], 1
    %10 = vsyncpa %s9, 0
    loop: start=0, step=1, limit=4
    $region2: #{tpu_custom_call.1} parent=1 // loop_pre_header
      _
    $region3: #{tpu_custom_call.1} parent=1 // loop_header
      %s12 = sphi 0, %s16
      %p13 = scmp.ge.s32.totalorder %s12, 4
      %s20 = sphi 0, %s20
      %s22 = sphi 0, %s20
      %s23 = sphi 0, %s22
      %s37 = sphi 0, %s23
      %s43 = sphi 0, %s45
      %s46 = sphi 0, %s43
      %s47 = sphi 0, %s46
      %s63 = sphi 0, %s47
      %s67 = sphi 0, %s67
      %s69 = sphi 0, %s67
      %s70 = sphi 0, %s69
      %s84 = sphi 0, %s70
      %s90 = sphi 0, %s92
      %s93 = sphi 0, %s90
      %s94 = sphi 0, %s93
      %s110 = sphi 0, %s94
    $region4: #{tpu_custom_call.1} parent=1 // loop_header_branch
      %15 = sbr.rel (%p13) target = $region8
    $region5: #{tpu_custom_call.1} parent=1 // loop_body
      %s17 = ssub.s32 %s12, 1
      %s18 = ssub.s32 %s12, 2
      %s19 = sadd.s32 %s12, 1
      %s21 = sadd.s32 %s20, 1
      %p24 = scmp.eq.s32.totalorder %s12, 1
      %p25 = scmp.ne.s32.totalorder %s20, %s22
      %p26 = scmp.eq.s32.totalorder %s12, 0
      %p27 = por %p25, %p26
      %p28 = scmp.ne.s32.totalorder %s20, %s22
      %p29 = scmp.eq.s32.totalorder %s17, 1
      %p30 = por %p28, %p29
      %p31 = scmp.ne.s32.totalorder %s22, %s23
      %p32 = scmp.eq.s32.totalorder %s17, 0
      %p33 = por %p31, %p32
      %p34 = scmp.ne.s32.totalorder %s22, %s23
      %p35 = scmp.eq.s32.totalorder %s18, 1
      %p36 = por %p34, %p35
      %p38 = scmp.ne.s32.totalorder %s23, %s37
      %p39 = scmp.eq.s32.totalorder %s18, 0
      %p40 = por %p38, %p39
      %s41 = ssub.s32 %s12, %s19
      %p42 = scmp.eq.s32.totalorder %s41, 0
      %s44 = sadd.s32 %s43, 1
      %s45 = scalar_select %p42, %s43, %s44
      %p48 = pneg %p42
      %p49 = scmp.eq.s32.totalorder %s12, 1
      %p50 = por %p48, %p49
      %p51 = scmp.ne.s32.totalorder %s43, %s46
      %p52 = scmp.eq.s32.totalorder %s12, 0
      %p53 = por %p51, %p52
      %p54 = scmp.ne.s32.totalorder %s43, %s46
      %p55 = scmp.eq.s32.totalorder %s17, 1
      %p56 = por %p54, %p55
      %p57 = scmp.ne.s32.totalorder %s46, %s47
      %p58 = scmp.eq.s32.totalorder %s17, 0
      %p59 = por %p57, %p58
      %p60 = scmp.ne.s32.totalorder %s46, %s47
      %p61 = scmp.eq.s32.totalorder %s18, 1
      %p62 = por %p60, %p61
      %p64 = scmp.ne.s32.totalorder %s47, %s63
      %p65 = scmp.eq.s32.totalorder %s18, 0
      %p66 = por %p64, %p65
      %s68 = sadd.s32 %s67, 1
      %p71 = scmp.eq.s32.totalorder %s12, 1
      %p72 = scmp.ne.s32.totalorder %s67, %s69
      %p73 = scmp.eq.s32.totalorder %s12, 0
      %p74 = por %p72, %p73
      %p75 = scmp.ne.s32.totalorder %s67, %s69
      %p76 = scmp.eq.s32.totalorder %s17, 1
      %p77 = por %p75, %p76
      %p78 = scmp.ne.s32.totalorder %s69, %s70
      %p79 = scmp.eq.s32.totalorder %s17, 0
      %p80 = por %p78, %p79
      %p81 = scmp.ne.s32.totalorder %s69, %s70
      %p82 = scmp.eq.s32.totalorder %s18, 1
      %p83 = por %p81, %p82
      %p85 = scmp.ne.s32.totalorder %s70, %s84
      %p86 = scmp.eq.s32.totalorder %s18, 0
      %p87 = por %p85, %p86
      %s88 = ssub.s32 %s12, %s19
      %p89 = scmp.eq.s32.totalorder %s88, 0
      %s91 = sadd.s32 %s90, 1
      %s92 = scalar_select %p89, %s90, %s91
      %p95 = pneg %p89
      %p96 = scmp.eq.s32.totalorder %s12, 1
      %p97 = por %p95, %p96
      %p98 = scmp.ne.s32.totalorder %s90, %s93
      %p99 = scmp.eq.s32.totalorder %s12, 0
      %p100 = por %p98, %p99
      %p101 = scmp.ne.s32.totalorder %s90, %s93
      %p102 = scmp.eq.s32.totalorder %s17, 1
      %p103 = por %p101, %p102
      %p104 = scmp.ne.s32.totalorder %s93, %s94
      %p105 = scmp.eq.s32.totalorder %s17, 0
      %p106 = por %p104, %p105
      %p107 = scmp.ne.s32.totalorder %s93, %s94
      %p108 = scmp.eq.s32.totalorder %s18, 1
      %p109 = por %p107, %p108
      %p111 = scmp.ne.s32.totalorder %s94, %s110
      %p112 = scmp.eq.s32.totalorder %s18, 0
      %p113 = por %p111, %p112
      %p114 = scmp.le.s32.totalorder 1, %s12
      %p115 = scmp.lt.s32.totalorder %s12, 3
      %p116 = pnand %p114, %p115
      %p117 = pneg %p116
      // Predicated region
      $region9: #{tpu_custom_call.1} parent=5 // pred_check
        _
      $region10: #{tpu_custom_call.1} parent=5 // pred_check_branch
        %119 = sbr.rel (%p116) target = $region12
      $region11: #{tpu_custom_call.1} parent=5 // pred_region
        %s120 = ssub.s32 %s12, 1
        // Predicated region
        $region13: #{tpu_custom_call.1} parent=11 // pred_check
          %p121 = pneg %p33
        $region14: #{tpu_custom_call.1} parent=11 // pred_check_branch
          %123 = sbr.rel (%p121) target = $region16
        $region15: #{tpu_custom_call.1} parent=11 // pred_region
          _
        $region16: #{tpu_custom_call.1} parent=11 // pred_fallthru
          _
        // Predicated region
        $region17: #{tpu_custom_call.1} parent=11 // pred_check
          %p124 = pneg %p80
        $region18: #{tpu_custom_call.1} parent=11 // pred_check_branch
          %126 = sbr.rel (%p124) target = $region20
        $region19: #{tpu_custom_call.1} parent=11 // pred_region
          _
        $region20: #{tpu_custom_call.1} parent=11 // pred_fallthru
          _
      $region12: #{tpu_custom_call.1} parent=5 // pred_fallthru
        _
      %p127 = scmp.lt.s32.totalorder %s12, 2
      // Predicated region
      $region21: #{tpu_custom_call.1} parent=5 // pred_check
        %p128 = pneg %p127
      $region22: #{tpu_custom_call.1} parent=5 // pred_check_branch
        %130 = sbr.rel (%p128) target = $region24
      $region23: #{tpu_custom_call.1} parent=5 // pred_region
        // Predicated region
        $region25: #{tpu_custom_call.1} parent=23 // pred_check
          %p131 = pneg %p53
        $region26: #{tpu_custom_call.1} parent=23 // pred_check_branch
          %133 = sbr.rel (%p131) target = $region28
        $region27: #{tpu_custom_call.1} parent=23 // pred_region
          %p134 = scmp.lt.s32.totalorder %s12, 1
          %s135 = scalar_select %p134, %s12, 1
          %s136 = smul.addr %s135, 8
          %s137 = scalar_lea.vmem %s1, %s136
        $region28: #{tpu_custom_call.1} parent=23 // pred_fallthru
          _
      $region24: #{tpu_custom_call.1} parent=5 // pred_fallthru
        _
      %p138 = scmp.le.s32.totalorder 1, %s12
      %p139 = scmp.lt.s32.totalorder %s12, 3
      %p140 = pnand %p138, %p139
      %p141 = pneg %p140
      // Predicated region
      $region29: #{tpu_custom_call.1} parent=5 // pred_check
        _
      $region30: #{tpu_custom_call.1} parent=5 // pred_check_branch
        %143 = sbr.rel (%p140) target = $region32
      $region31: #{tpu_custom_call.1} parent=5 // pred_region
        %s144 = ssub.s32 %s12, 1
        %p145 = pneg %p33
        %p146 = pneg %p30
        %p147 = scmp.lt.s32.totalorder %s17, 1
        %s148 = scalar_select %p147, %s17, 1
        %s149 = smul.addr %s148, 8
        %s150 = scalar_lea.vmem %s1, %s149
        %p151 = pneg %p59
        %p152 = pneg %p56
        %p153 = pneg %p80
        %p154 = pneg %p77
        %p155 = pneg %p106
        %p156 = pneg %p103
        %s157 = sand.u32 %s93, 1
        %s158 = scalar_lea.sflag [#allocation3], %s157
        %s159 = sand.u32 %s93, 1
        %s160 = smul.addr %s159, 8
        %s161 = scalar_lea.vmem [#allocation2], %s160
        %p162 = scmp.lt.s32.totalorder %s17, 1
        %s163 = scalar_select %p162, %s17, 1
        %s164 = smul.addr %s163, 8
        %s165 = scalar_lea.vmem %s1, %s164
        %v166 = vld [vmem:[%s0] sm:$0xff]
        %v167 = vld [vmem:[%s0 + $0x8] sm:$0xff]
        %v168 = vld [vmem:[%s165] sm:$0xff]
        %169 = vxpose.xlu0.b32.start [1/16] %v168, 128
        %170 = vxpose.xlu0.b32.cont [2/16] 0.0, 128
        %171 = vxpose.xlu0.b32.cont [3/16] 0.0, 128
        %172 = vxpose.xlu0.b32.cont [4/16] 0.0, 128
        %173 = vxpose.xlu0.b32.cont [5/16] 0.0, 128
        %174 = vxpose.xlu0.b32.cont [6/16] 0.0, 128
        %175 = vxpose.xlu0.b32.cont [7/16] 0.0, 128
        %176 = vxpose.xlu0.b32.cont [8/16] 0.0, 128
        %177 = vxpose.xlu0.b32.cont [9/16] 0.0, 128
        %178 = vxpose.xlu0.b32.cont [10/16] 0.0, 128
        %179 = vxpose.xlu0.b32.cont [11/16] 0.0, 128
        %180 = vxpose.xlu0.b32.cont [12/16] 0.0, 128
        %181 = vxpose.xlu0.b32.cont [13/16] 0.0, 128
        %182 = vxpose.xlu0.b32.cont [14/16] 0.0, 128
        %183 = vxpose.xlu0.b32.cont [15/16] 0.0, 128
        %184 = vxpose.xlu0.b32.end [16/16] 0.0, 128
        %v185 = vpop.trf.xlu0
        %v186 = vpop.trf.xlu0
        %v187 = vpop.trf.xlu0
        %v188 = vpop.trf.xlu0
        %v189 = vpop.trf.xlu0
        %v190 = vpop.trf.xlu0
        %v191 = vpop.trf.xlu0
        %v192 = vpop.trf.xlu0
        %v193 = vpop.trf.xlu0
        %v194 = vpop.trf.xlu0
        %v195 = vpop.trf.xlu0
        %v196 = vpop.trf.xlu0
        %v197 = vpop.trf.xlu0
        %v198 = vpop.trf.xlu0
        %v199 = vpop.trf.xlu0
        %v200 = vpop.trf.xlu0
        %v201 = vperm.slane %v166, 0
        %v202 = vperm.slane %v167, 0
        %204 = vset.pattern.permute.xlu0 0
        %205 = vperm.xlu0 %204, %v185
        %v206 = vpop.permute.xlu0 %205
        %209 = vset.pattern.permute.xlu0 0
        %210 = vperm.xlu0 %209, %v186
        %v211 = vpop.permute.xlu0 %210
        %214 = vset.pattern.permute.xlu0 0
        %215 = vperm.xlu0 %214, %v187
        %v216 = vpop.permute.xlu0 %215
        %219 = vset.pattern.permute.xlu0 0
        %220 = vperm.xlu0 %219, %v188
        %v221 = vpop.permute.xlu0 %220
        %224 = vset.pattern.permute.xlu0 0
        %225 = vperm.xlu0 %224, %v189
        %v226 = vpop.permute.xlu0 %225
        %229 = vset.pattern.permute.xlu0 0
        %230 = vperm.xlu0 %229, %v190
        %v231 = vpop.permute.xlu0 %230
        %234 = vset.pattern.permute.xlu0 0
        %235 = vperm.xlu0 %234, %v191
        %v236 = vpop.permute.xlu0 %235
        %239 = vset.pattern.permute.xlu0 0
        %240 = vperm.xlu0 %239, %v192
        %v241 = vpop.permute.xlu0 %240
        %244 = vset.pattern.permute.xlu0 0
        %245 = vperm.xlu0 %244, %v193
        %v246 = vpop.permute.xlu0 %245
        %249 = vset.pattern.permute.xlu0 0
        %250 = vperm.xlu0 %249, %v194
        %v251 = vpop.permute.xlu0 %250
        %254 = vset.pattern.permute.xlu0 0
        %255 = vperm.xlu0 %254, %v195
        %v256 = vpop.permute.xlu0 %255
        %259 = vset.pattern.permute.xlu0 0
        %260 = vperm.xlu0 %259, %v196
        %v261 = vpop.permute.xlu0 %260
        %264 = vset.pattern.permute.xlu0 0
        %265 = vperm.xlu0 %264, %v197
        %v266 = vpop.permute.xlu0 %265
        %269 = vset.pattern.permute.xlu0 0
        %270 = vperm.xlu0 %269, %v198
        %v271 = vpop.permute.xlu0 %270
        %274 = vset.pattern.permute.xlu0 0
        %275 = vperm.xlu0 %274, %v199
        %v276 = vpop.permute.xlu0 %275
        %279 = vset.pattern.permute.xlu0 0
        %280 = vperm.xlu0 %279, %v200
        %v281 = vpop.permute.xlu0 %280
        %v283 = vsub.f32 %v201, %v206
        %v284 = vsub.f32 %v202, %v206
        %v285 = vsub.f32 %v201, %v211
        %v286 = vsub.f32 %v202, %v211
        %v287 = vsub.f32 %v201, %v216
        %v288 = vsub.f32 %v202, %v216
        %v289 = vsub.f32 %v201, %v221
        %v290 = vsub.f32 %v202, %v221
        %v291 = vsub.f32 %v201, %v226
        %v292 = vsub.f32 %v202, %v226
        %v293 = vsub.f32 %v201, %v231
        %v294 = vsub.f32 %v202, %v231
        %v295 = vsub.f32 %v201, %v236
        %v296 = vsub.f32 %v202, %v236
        %v297 = vsub.f32 %v201, %v241
        %v298 = vsub.f32 %v202, %v241
        %v299 = vsub.f32 %v201, %v246
        %v300 = vsub.f32 %v202, %v246
        %v301 = vsub.f32 %v201, %v251
        %v302 = vsub.f32 %v202, %v251
        %v303 = vsub.f32 %v201, %v256
        %v304 = vsub.f32 %v202, %v256
        %v305 = vsub.f32 %v201, %v261
        %v306 = vsub.f32 %v202, %v261
        %v307 = vsub.f32 %v201, %v266
        %v308 = vsub.f32 %v202, %v266
        %v309 = vsub.f32 %v201, %v271
        %v310 = vsub.f32 %v202, %v271
        %v311 = vsub.f32 %v201, %v276
        %v312 = vsub.f32 %v202, %v276
        %v313 = vsub.f32 %v201, %v281
        %v314 = vsub.f32 %v202, %v281
        %v315 = vperm.slane %v166, 1
        %v316 = vperm.slane %v167, 1
        %317 = vset.pattern.permute.xlu0 1
        %318 = vperm.xlu0 %317, %v185
        %v319 = vpop.permute.xlu0 %318
        %321 = vset.pattern.permute.xlu0 1
        %322 = vperm.xlu0 %321, %v186
        %v323 = vpop.permute.xlu0 %322
        %325 = vset.pattern.permute.xlu0 1
        %326 = vperm.xlu0 %325, %v187
        %v327 = vpop.permute.xlu0 %326
        %329 = vset.pattern.permute.xlu0 1
        %330 = vperm.xlu0 %329, %v188
        %v331 = vpop.permute.xlu0 %330
        %333 = vset.pattern.permute.xlu0 1
        %334 = vperm.xlu0 %333, %v189
        %v335 = vpop.permute.xlu0 %334
        %337 = vset.pattern.permute.xlu0 1
        %338 = vperm.xlu0 %337, %v190
        %v339 = vpop.permute.xlu0 %338
        %341 = vset.pattern.permute.xlu0 1
        %342 = vperm.xlu0 %341, %v191
        %v343 = vpop.permute.xlu0 %342
        %345 = vset.pattern.permute.xlu0 1
        %346 = vperm.xlu0 %345, %v192
        %v347 = vpop.permute.xlu0 %346
        %349 = vset.pattern.permute.xlu0 1
        %350 = vperm.xlu0 %349, %v193
        %v351 = vpop.permute.xlu0 %350
        %353 = vset.pattern.permute.xlu0 1
        %354 = vperm.xlu0 %353, %v194
        %v355 = vpop.permute.xlu0 %354
        %357 = vset.pattern.permute.xlu0 1
        %358 = vperm.xlu0 %357, %v195
        %v359 = vpop.permute.xlu0 %358
        %361 = vset.pattern.permute.xlu0 1
        %362 = vperm.xlu0 %361, %v196
        %v363 = vpop.permute.xlu0 %362
        %365 = vset.pattern.permute.xlu0 1
        %366 = vperm.xlu0 %365, %v197
        %v367 = vpop.permute.xlu0 %366
        %369 = vset.pattern.permute.xlu0 1
        %370 = vperm.xlu0 %369, %v198
        %v371 = vpop.permute.xlu0 %370
        %373 = vset.pattern.permute.xlu0 1
        %374 = vperm.xlu0 %373, %v199
        %v375 = vpop.permute.xlu0 %374
        %377 = vset.pattern.permute.xlu0 1
        %378 = vperm.xlu0 %377, %v200
        %v379 = vpop.permute.xlu0 %378
        %v381 = vsub.f32 %v315, %v319
        %v382 = vsub.f32 %v316, %v319
        %v383 = vsub.f32 %v315, %v323
        %v384 = vsub.f32 %v316, %v323
        %v385 = vsub.f32 %v315, %v327
        %v386 = vsub.f32 %v316, %v327
        %v387 = vsub.f32 %v315, %v331
        %v388 = vsub.f32 %v316, %v331
        %v389 = vsub.f32 %v315, %v335
        %v390 = vsub.f32 %v316, %v335
        %v391 = vsub.f32 %v315, %v339
        %v392 = vsub.f32 %v316, %v339
        %v393 = vsub.f32 %v315, %v343
        %v394 = vsub.f32 %v316, %v343
        %v395 = vsub.f32 %v315, %v347
        %v396 = vsub.f32 %v316, %v347
        %v397 = vsub.f32 %v315, %v351
        %v398 = vsub.f32 %v316, %v351
        %v399 = vsub.f32 %v315, %v355
        %v400 = vsub.f32 %v316, %v355
        %v401 = vsub.f32 %v315, %v359
        %v402 = vsub.f32 %v316, %v359
        %v403 = vsub.f32 %v315, %v363
        %v404 = vsub.f32 %v316, %v363
        %v405 = vsub.f32 %v315, %v367
        %v406 = vsub.f32 %v316, %v367
        %v407 = vsub.f32 %v315, %v371
        %v408 = vsub.f32 %v316, %v371
        %v409 = vsub.f32 %v315, %v375
        %v410 = vsub.f32 %v316, %v375
        %v411 = vsub.f32 %v315, %v379
        %v412 = vsub.f32 %v316, %v379
        %v413 = vperm.slane %v166, 2
        %v414 = vperm.slane %v167, 2
        %415 = vset.pattern.permute.xlu0 2
        %416 = vperm.xlu0 %415, %v185
        %v417 = vpop.permute.xlu0 %416
        %419 = vset.pattern.permute.xlu0 2
        %420 = vperm.xlu0 %419, %v186
        %v421 = vpop.permute.xlu0 %420
        %423 = vset.pattern.permute.xlu0 2
        %424 = vperm.xlu0 %423, %v187
        %v425 = vpop.permute.xlu0 %424
        %427 = vset.pattern.permute.xlu0 2
        %428 = vperm.xlu0 %427, %v188
        %v429 = vpop.permute.xlu0 %428
        %431 = vset.pattern.permute.xlu0 2
        %432 = vperm.xlu0 %431, %v189
        %v433 = vpop.permute.xlu0 %432
        %435 = vset.pattern.permute.xlu0 2
        %436 = vperm.xlu0 %435, %v190
        %v437 = vpop.permute.xlu0 %436
        %439 = vset.pattern.permute.xlu0 2
        %440 = vperm.xlu0 %439, %v191
        %v441 = vpop.permute.xlu0 %440
        %443 = vset.pattern.permute.xlu0 2
        %444 = vperm.xlu0 %443, %v192
        %v445 = vpop.permute.xlu0 %444
        %447 = vset.pattern.permute.xlu0 2
        %448 = vperm.xlu0 %447, %v193
        %v449 = vpop.permute.xlu0 %448
        %451 = vset.pattern.permute.xlu0 2
        %452 = vperm.xlu0 %451, %v194
        %v453 = vpop.permute.xlu0 %452
        %455 = vset.pattern.permute.xlu0 2
        %456 = vperm.xlu0 %455, %v195
        %v457 = vpop.permute.xlu0 %456
        %459 = vset.pattern.permute.xlu0 2
        %460 = vperm.xlu0 %459, %v196
        %v461 = vpop.permute.xlu0 %460
        %463 = vset.pattern.permute.xlu0 2
        %464 = vperm.xlu0 %463, %v197
        %v465 = vpop.permute.xlu0 %464
        %467 = vset.pattern.permute.xlu0 2
        %468 = vperm.xlu0 %467, %v198
        %v469 = vpop.permute.xlu0 %468
        %471 = vset.pattern.permute.xlu0 2
        %472 = vperm.xlu0 %471, %v199
        %v473 = vpop.permute.xlu0 %472
        %475 = vset.pattern.permute.xlu0 2
        %476 = vperm.xlu0 %475, %v200
        %v477 = vpop.permute.xlu0 %476
        %v479 = vsub.f32 %v413, %v417
        %v480 = vsub.f32 %v414, %v417
        %v481 = vsub.f32 %v413, %v421
        %v482 = vsub.f32 %v414, %v421
        %v483 = vsub.f32 %v413, %v425
        %v484 = vsub.f32 %v414, %v425
        %v485 = vsub.f32 %v413, %v429
        %v486 = vsub.f32 %v414, %v429
        %v487 = vsub.f32 %v413, %v433
        %v488 = vsub.f32 %v414, %v433
        %v489 = vsub.f32 %v413, %v437
        %v490 = vsub.f32 %v414, %v437
        %v491 = vsub.f32 %v413, %v441
        %v492 = vsub.f32 %v414, %v441
        %v493 = vsub.f32 %v413, %v445
        %v494 = vsub.f32 %v414, %v445
        %v495 = vsub.f32 %v413, %v449
        %v496 = vsub.f32 %v414, %v449
        %v497 = vsub.f32 %v413, %v453
        %v498 = vsub.f32 %v414, %v453
        %v499 = vsub.f32 %v413, %v457
        %v500 = vsub.f32 %v414, %v457
        %v501 = vsub.f32 %v413, %v461
        %v502 = vsub.f32 %v414, %v461
        %v503 = vsub.f32 %v413, %v465
        %v504 = vsub.f32 %v414, %v465
        %v505 = vsub.f32 %v413, %v469
        %v506 = vsub.f32 %v414, %v469
        %v507 = vsub.f32 %v413, %v473
        %v508 = vsub.f32 %v414, %v473
        %v509 = vsub.f32 %v413, %v477
        %v510 = vsub.f32 %v414, %v477
        %v511 = vmul.f32 %v283, %v283
        %v512 = vmul.f32 %v284, %v284
        %v513 = vmul.f32 %v285, %v285
        %v514 = vmul.f32 %v286, %v286
        %v515 = vmul.f32 %v287, %v287
        %v516 = vmul.f32 %v288, %v288
        %v517 = vmul.f32 %v289, %v289
        %v518 = vmul.f32 %v290, %v290
        %v519 = vmul.f32 %v291, %v291
        %v520 = vmul.f32 %v292, %v292
        %v521 = vmul.f32 %v293, %v293
        %v522 = vmul.f32 %v294, %v294
        %v523 = vmul.f32 %v295, %v295
        %v524 = vmul.f32 %v296, %v296
        %v525 = vmul.f32 %v297, %v297
        %v526 = vmul.f32 %v298, %v298
        %v527 = vmul.f32 %v299, %v299
        %v528 = vmul.f32 %v300, %v300
        %v529 = vmul.f32 %v301, %v301
        %v530 = vmul.f32 %v302, %v302
        %v531 = vmul.f32 %v303, %v303
        %v532 = vmul.f32 %v304, %v304
        %v533 = vmul.f32 %v305, %v305
        %v534 = vmul.f32 %v306, %v306
        %v535 = vmul.f32 %v307, %v307
        %v536 = vmul.f32 %v308, %v308
        %v537 = vmul.f32 %v309, %v309
        %v538 = vmul.f32 %v310, %v310
        %v539 = vmul.f32 %v311, %v311
        %v540 = vmul.f32 %v312, %v312
        %v541 = vmul.f32 %v313, %v313
        %v542 = vmul.f32 %v314, %v314
        %v543 = vmul.f32 %v381, %v381
        %v544 = vmul.f32 %v382, %v382
        %v545 = vmul.f32 %v383, %v383
        %v546 = vmul.f32 %v384, %v384
        %v547 = vmul.f32 %v385, %v385
        %v548 = vmul.f32 %v386, %v386
        %v549 = vmul.f32 %v387, %v387
        %v550 = vmul.f32 %v388, %v388
        %v551 = vmul.f32 %v389, %v389
        %v552 = vmul.f32 %v390, %v390
        %v553 = vmul.f32 %v391, %v391
        %v554 = vmul.f32 %v392, %v392
        %v555 = vmul.f32 %v393, %v393
        %v556 = vmul.f32 %v394, %v394
        %v557 = vmul.f32 %v395, %v395
        %v558 = vmul.f32 %v396, %v396
        %v559 = vmul.f32 %v397, %v397
        %v560 = vmul.f32 %v398, %v398
        %v561 = vmul.f32 %v399, %v399
        %v562 = vmul.f32 %v400, %v400
        %v563 = vmul.f32 %v401, %v401
        %v564 = vmul.f32 %v402, %v402
        %v565 = vmul.f32 %v403, %v403
        %v566 = vmul.f32 %v404, %v404
        %v567 = vmul.f32 %v405, %v405
        %v568 = vmul.f32 %v406, %v406
        %v569 = vmul.f32 %v407, %v407
        %v570 = vmul.f32 %v408, %v408
        %v571 = vmul.f32 %v409, %v409
        %v572 = vmul.f32 %v410, %v410
        %v573 = vmul.f32 %v411, %v411
        %v574 = vmul.f32 %v412, %v412
        %v575 = vadd.f32 %v511, %v543
        %v576 = vadd.f32 %v512, %v544
        %v577 = vadd.f32 %v513, %v545
        %v578 = vadd.f32 %v514, %v546
        %v579 = vadd.f32 %v515, %v547
        %v580 = vadd.f32 %v516, %v548
        %v581 = vadd.f32 %v517, %v549
        %v582 = vadd.f32 %v518, %v550
        %v583 = vadd.f32 %v519, %v551
        %v584 = vadd.f32 %v520, %v552
        %v585 = vadd.f32 %v521, %v553
        %v586 = vadd.f32 %v522, %v554
        %v587 = vadd.f32 %v523, %v555
        %v588 = vadd.f32 %v524, %v556
        %v589 = vadd.f32 %v525, %v557
        %v590 = vadd.f32 %v526, %v558
        %v591 = vadd.f32 %v527, %v559
        %v592 = vadd.f32 %v528, %v560
        %v593 = vadd.f32 %v529, %v561
        %v594 = vadd.f32 %v530, %v562
        %v595 = vadd.f32 %v531, %v563
        %v596 = vadd.f32 %v532, %v564
        %v597 = vadd.f32 %v533, %v565
        %v598 = vadd.f32 %v534, %v566
        %v599 = vadd.f32 %v535, %v567
        %v600 = vadd.f32 %v536, %v568
        %v601 = vadd.f32 %v537, %v569
        %v602 = vadd.f32 %v538, %v570
        %v603 = vadd.f32 %v539, %v571
        %v604 = vadd.f32 %v540, %v572
        %v605 = vadd.f32 %v541, %v573
        %v606 = vadd.f32 %v542, %v574
        %v607 = vmul.f32 %v479, %v479
        %v608 = vmul.f32 %v480, %v480
        %v609 = vmul.f32 %v481, %v481
        %v610 = vmul.f32 %v482, %v482
        %v611 = vmul.f32 %v483, %v483
        %v612 = vmul.f32 %v484, %v484
        %v613 = vmul.f32 %v485, %v485
        %v614 = vmul.f32 %v486, %v486
        %v615 = vmul.f32 %v487, %v487
        %v616 = vmul.f32 %v488, %v488
        %v617 = vmul.f32 %v489, %v489
        %v618 = vmul.f32 %v490, %v490
        %v619 = vmul.f32 %v491, %v491
        %v620 = vmul.f32 %v492, %v492
        %v621 = vmul.f32 %v493, %v493
        %v622 = vmul.f32 %v494, %v494
        %v623 = vmul.f32 %v495, %v495
        %v624 = vmul.f32 %v496, %v496
        %v625 = vmul.f32 %v497, %v497
        %v626 = vmul.f32 %v498, %v498
        %v627 = vmul.f32 %v499, %v499
        %v628 = vmul.f32 %v500, %v500
        %v629 = vmul.f32 %v501, %v501
        %v630 = vmul.f32 %v502, %v502
        %v631 = vmul.f32 %v503, %v503
        %v632 = vmul.f32 %v504, %v504
        %v633 = vmul.f32 %v505, %v505
        %v634 = vmul.f32 %v506, %v506
        %v635 = vmul.f32 %v507, %v507
        %v636 = vmul.f32 %v508, %v508
        %v637 = vmul.f32 %v509, %v509
        %v638 = vmul.f32 %v510, %v510
        %v639 = vadd.f32 %v575, %v607
        %v640 = vadd.f32 %v576, %v608
        %v641 = vadd.f32 %v577, %v609
        %v642 = vadd.f32 %v578, %v610
        %v643 = vadd.f32 %v579, %v611
        %v644 = vadd.f32 %v580, %v612
        %v645 = vadd.f32 %v581, %v613
        %v646 = vadd.f32 %v582, %v614
        %v647 = vadd.f32 %v583, %v615
        %v648 = vadd.f32 %v584, %v616
        %v649 = vadd.f32 %v585, %v617
        %v650 = vadd.f32 %v586, %v618
        %v651 = vadd.f32 %v587, %v619
        %v652 = vadd.f32 %v588, %v620
        %v653 = vadd.f32 %v589, %v621
        %v654 = vadd.f32 %v590, %v622
        %v655 = vadd.f32 %v591, %v623
        %v656 = vadd.f32 %v592, %v624
        %v657 = vadd.f32 %v593, %v625
        %v658 = vadd.f32 %v594, %v626
        %v659 = vadd.f32 %v595, %v627
        %v660 = vadd.f32 %v596, %v628
        %v661 = vadd.f32 %v597, %v629
        %v662 = vadd.f32 %v598, %v630
        %v663 = vadd.f32 %v599, %v631
        %v664 = vadd.f32 %v600, %v632
        %v665 = vadd.f32 %v601, %v633
        %v666 = vadd.f32 %v602, %v634
        %v667 = vadd.f32 %v603, %v635
        %v668 = vadd.f32 %v604, %v636
        %v669 = vadd.f32 %v605, %v637
        %v670 = vadd.f32 %v606, %v638
        %vm671 = vcmp.le.f32.partialorder %v639, 0.01
        %vm672 = vcmp.le.f32.partialorder %v640, 0.01
        %vm673 = vcmp.le.f32.partialorder %v641, 0.01
        %vm674 = vcmp.le.f32.partialorder %v642, 0.01
        %vm675 = vcmp.le.f32.partialorder %v643, 0.01
        %vm676 = vcmp.le.f32.partialorder %v644, 0.01
        %vm677 = vcmp.le.f32.partialorder %v645, 0.01
        %vm678 = vcmp.le.f32.partialorder %v646, 0.01
        %vm679 = vcmp.le.f32.partialorder %v647, 0.01
        %vm680 = vcmp.le.f32.partialorder %v648, 0.01
        %vm681 = vcmp.le.f32.partialorder %v649, 0.01
        %vm682 = vcmp.le.f32.partialorder %v650, 0.01
        %vm683 = vcmp.le.f32.partialorder %v651, 0.01
        %vm684 = vcmp.le.f32.partialorder %v652, 0.01
        %vm685 = vcmp.le.f32.partialorder %v653, 0.01
        %vm686 = vcmp.le.f32.partialorder %v654, 0.01
        %vm687 = vcmp.le.f32.partialorder %v655, 0.01
        %vm688 = vcmp.le.f32.partialorder %v656, 0.01
        %vm689 = vcmp.le.f32.partialorder %v657, 0.01
        %vm690 = vcmp.le.f32.partialorder %v658, 0.01
        %vm691 = vcmp.le.f32.partialorder %v659, 0.01
        %vm692 = vcmp.le.f32.partialorder %v660, 0.01
        %vm693 = vcmp.le.f32.partialorder %v661, 0.01
        %vm694 = vcmp.le.f32.partialorder %v662, 0.01
        %vm695 = vcmp.le.f32.partialorder %v663, 0.01
        %vm696 = vcmp.le.f32.partialorder %v664, 0.01
        %vm697 = vcmp.le.f32.partialorder %v665, 0.01
        %vm698 = vcmp.le.f32.partialorder %v666, 0.01
        %vm699 = vcmp.le.f32.partialorder %v667, 0.01
        %vm700 = vcmp.le.f32.partialorder %v668, 0.01
        %vm701 = vcmp.le.f32.partialorder %v669, 0.01
        %vm702 = vcmp.le.f32.partialorder %v670, 0.01
        %v703 = vsel %vm671, 1, 0
        %v704 = vsel %vm672, 1, 0
        %v705 = vsel %vm673, 1, 0
        %v706 = vsel %vm674, 1, 0
        %v707 = vsel %vm675, 1, 0
        %v708 = vsel %vm676, 1, 0
        %v709 = vsel %vm677, 1, 0
        %v710 = vsel %vm678, 1, 0
        %v711 = vsel %vm679, 1, 0
        %v712 = vsel %vm680, 1, 0
        %v713 = vsel %vm681, 1, 0
        %v714 = vsel %vm682, 1, 0
        %v715 = vsel %vm683, 1, 0
        %v716 = vsel %vm684, 1, 0
        %v717 = vsel %vm685, 1, 0
        %v718 = vsel %vm686, 1, 0
        %v719 = vsel %vm687, 1, 0
        %v720 = vsel %vm688, 1, 0
        %v721 = vsel %vm689, 1, 0
        %v722 = vsel %vm690, 1, 0
        %v723 = vsel %vm691, 1, 0
        %v724 = vsel %vm692, 1, 0
        %v725 = vsel %vm693, 1, 0
        %v726 = vsel %vm694, 1, 0
        %v727 = vsel %vm695, 1, 0
        %v728 = vsel %vm696, 1, 0
        %v729 = vsel %vm697, 1, 0
        %v730 = vsel %vm698, 1, 0
        %v731 = vsel %vm699, 1, 0
        %v732 = vsel %vm700, 1, 0
        %v733 = vsel %vm701, 1, 0
        %v734 = vsel %vm702, 1, 0
        %v735 = vcvt.s32.f32 %v703
        %v736 = vcvt.s32.f32 %v704
        %v737 = vcvt.s32.f32 %v705
        %v738 = vcvt.s32.f32 %v706
        %v739 = vcvt.s32.f32 %v707
        %v740 = vcvt.s32.f32 %v708
        %v741 = vcvt.s32.f32 %v709
        %v742 = vcvt.s32.f32 %v710
        %v743 = vcvt.s32.f32 %v711
        %v744 = vcvt.s32.f32 %v712
        %v745 = vcvt.s32.f32 %v713
        %v746 = vcvt.s32.f32 %v714
        %v747 = vcvt.s32.f32 %v715
        %v748 = vcvt.s32.f32 %v716
        %v749 = vcvt.s32.f32 %v717
        %v750 = vcvt.s32.f32 %v718
        %v751 = vcvt.s32.f32 %v719
        %v752 = vcvt.s32.f32 %v720
        %v753 = vcvt.s32.f32 %v721
        %v754 = vcvt.s32.f32 %v722
        %v755 = vcvt.s32.f32 %v723
        %v756 = vcvt.s32.f32 %v724
        %v757 = vcvt.s32.f32 %v725
        %v758 = vcvt.s32.f32 %v726
        %v759 = vcvt.s32.f32 %v727
        %v760 = vcvt.s32.f32 %v728
        %v761 = vcvt.s32.f32 %v729
        %v762 = vcvt.s32.f32 %v730
        %v763 = vcvt.s32.f32 %v731
        %v764 = vcvt.s32.f32 %v732
        %v765 = vcvt.s32.f32 %v733
        %v766 = vcvt.s32.f32 %v734
        %v767 = vld [vmem:[%s2] sm:$0xff]
        %v768 = vld [vmem:[%s2 + $0x8] sm:$0xff]
        %v769 = vld [vmem:[%s2 + $0x10] sm:$0xff]
        %v770 = vld [vmem:[%s2 + $0x18] sm:$0xff]
        %v771 = vld [vmem:[%s2 + $0x20] sm:$0xff]
        %v772 = vld [vmem:[%s2 + $0x28] sm:$0xff]
        %v773 = vld [vmem:[%s2 + $0x30] sm:$0xff]
        %v774 = vld [vmem:[%s2 + $0x38] sm:$0xff]
        %v775 = vld [vmem:[%s2 + $0x40] sm:$0xff]
        %v776 = vld [vmem:[%s2 + $0x48] sm:$0xff]
        %v777 = vld [vmem:[%s2 + $0x50] sm:$0xff]
        %v778 = vld [vmem:[%s2 + $0x58] sm:$0xff]
        %v779 = vld [vmem:[%s2 + $0x60] sm:$0xff]
        %v780 = vld [vmem:[%s2 + $0x68] sm:$0xff]
        %v781 = vld [vmem:[%s2 + $0x70] sm:$0xff]
        %v782 = vld [vmem:[%s2 + $0x78] sm:$0xff]
        %v783 = vld [vmem:[%s2 + $0x80] sm:$0xff]
        %v784 = vld [vmem:[%s2 + $0x88] sm:$0xff]
        %v785 = vld [vmem:[%s2 + $0x90] sm:$0xff]
        %v786 = vld [vmem:[%s2 + $0x98] sm:$0xff]
        %v787 = vld [vmem:[%s2 + $0xa0] sm:$0xff]
        %v788 = vld [vmem:[%s2 + $0xa8] sm:$0xff]
        %v789 = vld [vmem:[%s2 + $0xb0] sm:$0xff]
        %v790 = vld [vmem:[%s2 + $0xb8] sm:$0xff]
        %v791 = vld [vmem:[%s2 + $0xc0] sm:$0xff]
        %v792 = vld [vmem:[%s2 + $0xc8] sm:$0xff]
        %v793 = vld [vmem:[%s2 + $0xd0] sm:$0xff]
        %v794 = vld [vmem:[%s2 + $0xd8] sm:$0xff]
        %v795 = vld [vmem:[%s2 + $0xe0] sm:$0xff]
        %v796 = vld [vmem:[%s2 + $0xe8] sm:$0xff]
        %v797 = vld [vmem:[%s2 + $0xf0] sm:$0xff]
        %v798 = vld [vmem:[%s2 + $0xf8] sm:$0xff]
        %799 = vmatpush.msra.mxu0 %v782
        %800 = vmatpush.msra.mxu0 %v781
        %801 = vmatpush.msra.mxu0 %v780
        %802 = vmatpush.msra.mxu0 %v779
        %803 = vmatpush.msra.mxu0 %v778
        %804 = vmatpush.msra.mxu0 %v777
        %805 = vmatpush.msra.mxu0 %v776
        %806 = vmatpush.msra.mxu0 %v775
        %807 = vmatpush.msra.mxu0 %v774
        %808 = vmatpush.msra.mxu0 %v773
        %809 = vmatpush.msra.mxu0 %v772
        %810 = vmatpush.msra.mxu0 %v771
        %811 = vmatpush.msra.mxu0 %v770
        %812 = vmatpush.msra.mxu0 %v769
        %813 = vmatpush.msra.mxu0 %v768
        %814 = vmatpush.msra.mxu0 %v767
        %815 = vmatmul.f32.gmra.mxu0 %v735
        %v816 = vpop.f32.mrf.mxu0
        %v817 = vadd.f32 0.0, %v816
        %818 = vmatmul.f32.gmra.mxu0 %v737
        %v819 = vpop.f32.mrf.mxu0
        %v820 = vadd.f32 0.0, %v819
        %821 = vmatmul.f32.gmra.mxu0 %v739
        %v822 = vpop.f32.mrf.mxu0
        %v823 = vadd.f32 0.0, %v822
        %824 = vmatmul.f32.gmra.mxu0 %v741
        %v825 = vpop.f32.mrf.mxu0
        %v826 = vadd.f32 0.0, %v825
        %827 = vmatmul.f32.gmra.mxu0 %v743
        %v828 = vpop.f32.mrf.mxu0
        %v829 = vadd.f32 0.0, %v828
        %830 = vmatmul.f32.gmra.mxu0 %v745
        %v831 = vpop.f32.mrf.mxu0
        %v832 = vadd.f32 0.0, %v831
        %833 = vmatmul.f32.gmra.mxu0 %v747
        %v834 = vpop.f32.mrf.mxu0
        %v835 = vadd.f32 0.0, %v834
        %836 = vmatmul.f32.gmra.mxu0 %v749
        %v837 = vpop.f32.mrf.mxu0
        %v838 = vadd.f32 0.0, %v837
        %839 = vmatmul.f32.gmra.mxu0 %v751
        %v840 = vpop.f32.mrf.mxu0
        %v841 = vadd.f32 0.0, %v840
        %842 = vmatmul.f32.gmra.mxu0 %v753
        %v843 = vpop.f32.mrf.mxu0
        %v844 = vadd.f32 0.0, %v843
        %845 = vmatmul.f32.gmra.mxu0 %v755
        %v846 = vpop.f32.mrf.mxu0
        %v847 = vadd.f32 0.0, %v846
        %848 = vmatmul.f32.gmra.mxu0 %v757
        %v849 = vpop.f32.mrf.mxu0
        %v850 = vadd.f32 0.0, %v849
        %851 = vmatmul.f32.gmra.mxu0 %v759
        %v852 = vpop.f32.mrf.mxu0
        %v853 = vadd.f32 0.0, %v852
        %854 = vmatmul.f32.gmra.mxu0 %v761
        %v855 = vpop.f32.mrf.mxu0
        %v856 = vadd.f32 0.0, %v855
        %857 = vmatmul.f32.gmra.mxu0 %v763
        %v858 = vpop.f32.mrf.mxu0
        %v859 = vadd.f32 0.0, %v858
        %860 = vmatmul.f32.gmra.mxu0 %v765
        %v861 = vpop.f32.mrf.mxu0
        %v862 = vadd.f32 0.0, %v861
        %863 = vdwg.mxu0
        %864 = vmatpush.msra.mxu0 %v798
        %865 = vmatpush.msra.mxu0 %v797
        %866 = vmatpush.msra.mxu0 %v796
        %867 = vmatpush.msra.mxu0 %v795
        %868 = vmatpush.msra.mxu0 %v794
        %869 = vmatpush.msra.mxu0 %v793
        %870 = vmatpush.msra.mxu0 %v792
        %871 = vmatpush.msra.mxu0 %v791
        %872 = vmatpush.msra.mxu0 %v790
        %873 = vmatpush.msra.mxu0 %v789
        %874 = vmatpush.msra.mxu0 %v788
        %875 = vmatpush.msra.mxu0 %v787
        %876 = vmatpush.msra.mxu0 %v786
        %877 = vmatpush.msra.mxu0 %v785
        %878 = vmatpush.msra.mxu0 %v784
        %879 = vmatpush.msra.mxu0 %v783
        %880 = vmatmul.f32.gmra.mxu0 %v736
        %v881 = vpop.f32.mrf.mxu0
        %v882 = vadd.f32 %v817, %v881
        %883 = vmatmul.f32.gmra.mxu0 %v738
        %v884 = vpop.f32.mrf.mxu0
        %v885 = vadd.f32 %v820, %v884
        %886 = vmatmul.f32.gmra.mxu0 %v740
        %v887 = vpop.f32.mrf.mxu0
        %v888 = vadd.f32 %v823, %v887
        %889 = vmatmul.f32.gmra.mxu0 %v742
        %v890 = vpop.f32.mrf.mxu0
        %v891 = vadd.f32 %v826, %v890
        %892 = vmatmul.f32.gmra.mxu0 %v744
        %v893 = vpop.f32.mrf.mxu0
        %v894 = vadd.f32 %v829, %v893
        %895 = vmatmul.f32.gmra.mxu0 %v746
        %v896 = vpop.f32.mrf.mxu0
        %v897 = vadd.f32 %v832, %v896
        %898 = vmatmul.f32.gmra.mxu0 %v748
        %v899 = vpop.f32.mrf.mxu0
        %v900 = vadd.f32 %v835, %v899
        %901 = vmatmul.f32.gmra.mxu0 %v750
        %v902 = vpop.f32.mrf.mxu0
        %v903 = vadd.f32 %v838, %v902
        %904 = vmatmul.f32.gmra.mxu0 %v752
        %v905 = vpop.f32.mrf.mxu0
        %v906 = vadd.f32 %v841, %v905
        %907 = vmatmul.f32.gmra.mxu0 %v754
        %v908 = vpop.f32.mrf.mxu0
        %v909 = vadd.f32 %v844, %v908
        %910 = vmatmul.f32.gmra.mxu0 %v756
        %v911 = vpop.f32.mrf.mxu0
        %v912 = vadd.f32 %v847, %v911
        %913 = vmatmul.f32.gmra.mxu0 %v758
        %v914 = vpop.f32.mrf.mxu0
        %v915 = vadd.f32 %v850, %v914
        %916 = vmatmul.f32.gmra.mxu0 %v760
        %v917 = vpop.f32.mrf.mxu0
        %v918 = vadd.f32 %v853, %v917
        %919 = vmatmul.f32.gmra.mxu0 %v762
        %v920 = vpop.f32.mrf.mxu0
        %v921 = vadd.f32 %v856, %v920
        %922 = vmatmul.f32.gmra.mxu0 %v764
        %v923 = vpop.f32.mrf.mxu0
        %v924 = vadd.f32 %v859, %v923
        %925 = vmatmul.f32.gmra.mxu0 %v766
        %v926 = vpop.f32.mrf.mxu0
        %v927 = vadd.f32 %v862, %v926
        %928 = vdwg.mxu0
        %929 = vxpose.xlu0.b32.start [1/16] %v882, 128
        %930 = vxpose.xlu0.b32.cont [2/16] %v885, 128
        %931 = vxpose.xlu0.b32.cont [3/16] %v888, 128
        %932 = vxpose.xlu0.b32.cont [4/16] %v891, 128
        %933 = vxpose.xlu0.b32.cont [5/16] %v894, 128
        %934 = vxpose.xlu0.b32.cont [6/16] %v897, 128
        %935 = vxpose.xlu0.b32.cont [7/16] %v900, 128
        %936 = vxpose.xlu0.b32.cont [8/16] %v903, 128
        %937 = vxpose.xlu0.b32.cont [9/16] %v906, 128
        %938 = vxpose.xlu0.b32.cont [10/16] %v909, 128
        %939 = vxpose.xlu0.b32.cont [11/16] %v912, 128
        %940 = vxpose.xlu0.b32.cont [12/16] %v915, 128
        %941 = vxpose.xlu0.b32.cont [13/16] %v918, 128
        %942 = vxpose.xlu0.b32.cont [14/16] %v921, 128
        %943 = vxpose.xlu0.b32.cont [15/16] %v924, 128
        %944 = vxpose.xlu0.b32.end [16/16] %v927, 128
        %v945 = vpop.trf.xlu0
        %v946 = vpop.trf.xlu0
        %v947 = vpop.trf.xlu0
        %v948 = vpop.trf.xlu0
        %v949 = vpop.trf.xlu0
        %v950 = vpop.trf.xlu0
        %v951 = vpop.trf.xlu0
        %v952 = vpop.trf.xlu0
        %v953 = vpop.trf.xlu0
        %v954 = vpop.trf.xlu0
        %v955 = vpop.trf.xlu0
        %v956 = vpop.trf.xlu0
        %v957 = vpop.trf.xlu0
        %v958 = vpop.trf.xlu0
        %v959 = vpop.trf.xlu0
        %v960 = vpop.trf.xlu0
        %v961 = vmax.f32 %v945, 1.0
        %v962 = vrcp.pop %v961
        %v963 = vmul.f32 %v961, %v962
        %v964 = vsub.f32 1.0, %v963
        %v965 = vmul.f32 %v962, %v964
        %v966 = vadd.f32 %v962, %v965
        %vm967 = vweird.f32 %v961
        %vm968 = vweird.f32 %v962
        %vm969 = vmor %vm967, %vm968
        %v970 = vsel %vm969, %v962, %v966
        %v971 = vand.u32 2147483647, %v961
        %vm972 = vcmp.eq.f32.partialorder %v971, 8.507059e+37
        %v973 = vand.u32 %v961, 2147483648
        %v974 = vor.u32 1.1754944e-38, %v973
        %v975 = vsel %vm972, %v974, %v970
        %v976 = vmul.f32 1.0, %v975
        %v978 = vrot.slane %v976, 7
        %v980 = vmul.f32 %v945, %v978
        %v981 = vrot.slane %v976, 6
        %v983 = vmul.f32 %v945, %v981
        %v984 = vrot.slane %v976, 5
        %v986 = vmul.f32 %v945, %v984
        %v987 = vrot.slane %v976, 4
        %v989 = vmul.f32 %v945, %v987
        %v990 = vmul.f32 %v980, %v980
        %v992 = vrot.slane %v990, 5
        %v994 = vsub.f32 %v989, %v992
        %v995 = vrot.slane %v976, 3
        %v997 = vmul.f32 %v945, %v995
        %v999 = vrot.slane %v983, 1
        %v1001 = vmul.f32 %v980, %v999
        %v1003 = vrot.slane %v1001, 4
        %v1005 = vsub.f32 %v997, %v1003
        %v1006 = vrot.slane %v976, 2
        %v1008 = vmul.f32 %v945, %v1006
        %v1010 = vrot.slane %v986, 2
        %v1012 = vmul.f32 %v980, %v1010
        %v1014 = vrot.slane %v1012, 3
        %v1016 = vsub.f32 %v1008, %v1014
        %v1017 = vrot.slane %v976, 1
        %v1019 = vmul.f32 %v945, %v1017
        %v1020 = vmul.f32 %v983, %v983
        %v1022 = vrot.slane %v1020, 3
        %v1024 = vsub.f32 %v1019, %v1022
        %v1025 = vmul.f32 %v946, %v976
        %v1026 = vrot.slane %v986, 1
        %v1028 = vmul.f32 %v983, %v1026
        %v1030 = vrot.slane %v1028, 2
        %v1032 = vsub.f32 %v1025, %v1030
        %v1033 = vmul.f32 %v946, %v978
        %v1034 = vmul.f32 %v986, %v986
        %v1036 = vrot.slane %v1034, 2
        %v1038 = vsub.f32 %v1033, %v1036
        %v1040 = vrot.slane %v1024, 3
        %v1042 = vadd.f32 %v994, %v1040
        %v1044 = vrot.slane %v1038, 5
        %v1046 = vadd.f32 %v1042, %v1044
        %v1047 = vmax.f32 %v1046, 1e-12
        %v1048 = vrcp.pop %v1047
        %v1049 = vmul.f32 %v1047, %v1048
        %v1050 = vsub.f32 1.0, %v1049
        %v1051 = vmul.f32 %v1048, %v1050
        %v1052 = vadd.f32 %v1048, %v1051
        %vm1053 = vweird.f32 %v1047
        %vm1054 = vweird.f32 %v1048
        %vm1055 = vmor %vm1053, %vm1054
        %v1056 = vsel %vm1055, %v1048, %v1052
        %v1057 = vand.u32 2147483647, %v1047
        %vm1058 = vcmp.eq.f32.partialorder %v1057, 8.507059e+37
        %v1059 = vand.u32 %v1047, 2147483648
        %v1060 = vor.u32 1.1754944e-38, %v1059
        %v1061 = vsel %vm1058, %v1060, %v1056
        %v1062 = vmul.f32 1.0, %v1061
        %v1063 = vmul.f32 %v994, %v1062
        %v1065 = vrot.slane %v1062, 7
        %v1067 = vmul.f32 %v1005, %v1065
        %v1068 = vrot.slane %v1062, 6
        %v1070 = vmul.f32 %v1016, %v1068
        %v1071 = vrot.slane %v1062, 5
        %v1073 = vmul.f32 %v1024, %v1071
        %v1074 = vrot.slane %v1062, 4
        %v1076 = vmul.f32 %v1032, %v1074
        %v1077 = vrot.slane %v1062, 3
        %v1079 = vmul.f32 %v1038, %v1077
        %v1081 = vrot.slane %v1073, 3
        %v1083 = vadd.f32 %v1063, %v1081
        %v1085 = vrot.slane %v1079, 5
        %v1087 = vadd.f32 %v1083, %v1085
        %v1088 = vmul.f32 %v1063, %v1081
        %v1089 = vmul.f32 %v1067, %v1067
        %v1091 = vrot.slane %v1089, 1
        %v1093 = vsub.f32 %v1088, %v1091
        %v1094 = vmul.f32 %v1063, %v1085
        %v1095 = vmul.f32 %v1070, %v1070
        %v1097 = vrot.slane %v1095, 2
        %v1099 = vsub.f32 %v1094, %v1097
        %v1100 = vadd.f32 %v1093, %v1099
        %v1101 = vrot.slane %v1079, 2
        %v1103 = vmul.f32 %v1073, %v1101
        %v1104 = vmul.f32 %v1076, %v1076
        %v1106 = vrot.slane %v1104, 1
        %v1108 = vsub.f32 %v1103, %v1106
        %v1110 = vrot.slane %v1108, 3
        %v1112 = vadd.f32 %v1100, %v1110
        %v1113 = vmul.f32 %v1063, %v1110
        %v1114 = vrot.slane %v1079, 4
        %v1116 = vmul.f32 %v1067, %v1114
        %v1118 = vrot.slane %v1070, 6
        %v1120 = vmul.f32 %v1076, %v1118
        %v1122 = vrot.slane %v1120, 3
        %v1124 = vsub.f32 %v1116, %v1122
        %v1125 = vmul.f32 %v1067, %v1124
        %v1127 = vrot.slane %v1125, 1
        %v1129 = vsub.f32 %v1113, %v1127
        %v1131 = vrot.slane %v1076, 3
        %v1133 = vmul.f32 %v1067, %v1131
        %v1134 = vrot.slane %v1070, 7
        %v1136 = vmul.f32 %v1073, %v1134
        %v1138 = vrot.slane %v1136, 2
        %v1140 = vsub.f32 %v1133, %v1138
        %v1142 = vrot.slane %v1140, 7
        %v1144 = vmul.f32 %v1070, %v1142
        %v1146 = vrot.slane %v1144, 2
        %v1148 = vadd.f32 %v1129, %v1146
        %v1149 = vmul.f32 %v1087, 0.0
        %v1150 = vsub.f32 %v1149, %v1112
        %v1151 = vmul.f32 %v1150, 0.0
        %v1152 = vadd.f32 %v1151, %v1148
        %v1153 = vmul.f32 %v1087, 2.0
        %v1154 = vmul.f32 %v1153, 0.0
        %v1155 = vsub.f32 %v1154, %v1112
        %v1156 = vand.u32 2147483647, %v1155
        %vm1157 = vcmp.gt.f32.partialorder %v1156, 1e-20
        %v1158 = vsel %vm1157, %v1155, 1.0
        %v1159 = vrcp.pop %v1158
        %v1160 = vmul.f32 %v1158, %v1159
        %v1161 = vsub.f32 1.0, %v1160
        %v1162 = vmul.f32 %v1159, %v1161
        %v1163 = vadd.f32 %v1159, %v1162
        %vm1164 = vweird.f32 %v1158
        %vm1165 = vweird.f32 %v1159
        %vm1166 = vmor %vm1164, %vm1165
        %v1167 = vsel %vm1166, %v1159, %v1163
        %v1168 = vand.u32 2147483647, %v1158
        %vm1169 = vcmp.eq.f32.partialorder %v1168, 8.507059e+37
        %v1170 = vand.u32 %v1158, 2147483648
        %v1171 = vor.u32 1.1754944e-38, %v1170
        %v1172 = vsel %vm1169, %v1171, %v1167
        %v1173 = vmul.f32 %v1152, %v1172
        %v1174 = vsel %vm1157, %v1173, 0.0
        %v1175 = vsub.f32 0.0, %v1174
        %v1176 = vsub.f32 %v1087, %v1175
        %v1177 = vmul.f32 %v1176, %v1175
        %v1178 = vsub.f32 %v1177, %v1112
        %v1179 = vmul.f32 %v1178, %v1175
        %v1180 = vadd.f32 %v1179, %v1148
        %v1181 = vmul.f32 %v1175, 3.0
        %v1182 = vsub.f32 %v1153, %v1181
        %v1183 = vmul.f32 %v1182, %v1175
        %v1184 = vsub.f32 %v1183, %v1112
        %v1185 = vand.u32 2147483647, %v1184
        %vm1186 = vcmp.gt.f32.partialorder %v1185, 1e-20
        %v1187 = vsel %vm1186, %v1184, 1.0
        %v1188 = vrcp.pop %v1187
        %v1189 = vmul.f32 %v1187, %v1188
        %v1190 = vsub.f32 1.0, %v1189
        %v1191 = vmul.f32 %v1188, %v1190
        %v1192 = vadd.f32 %v1188, %v1191
        %vm1193 = vweird.f32 %v1187
        %vm1194 = vweird.f32 %v1188
        %vm1195 = vmor %vm1193, %vm1194
        %v1196 = vsel %vm1195, %v1188, %v1192
        %v1197 = vand.u32 2147483647, %v1187
        %vm1198 = vcmp.eq.f32.partialorder %v1197, 8.507059e+37
        %v1199 = vand.u32 %v1187, 2147483648
        %v1200 = vor.u32 1.1754944e-38, %v1199
        %v1201 = vsel %vm1198, %v1200, %v1196
        %v1202 = vmul.f32 %v1180, %v1201
        %v1203 = vsel %vm1186, %v1202, 0.0
        %v1204 = vsub.f32 %v1175, %v1203
        %v1205 = vsub.f32 %v1087, %v1204
        %v1206 = vmul.f32 %v1205, %v1204
        %v1207 = vsub.f32 %v1206, %v1112
        %v1208 = vmul.f32 %v1207, %v1204
        %v1209 = vadd.f32 %v1208, %v1148
        %v1210 = vmul.f32 %v1204, 3.0
        %v1211 = vsub.f32 %v1153, %v1210
        %v1212 = vmul.f32 %v1211, %v1204
        %v1213 = vsub.f32 %v1212, %v1112
        %v1214 = vand.u32 2147483647, %v1213
        %vm1215 = vcmp.gt.f32.partialorder %v1214, 1e-20
        %v1216 = vsel %vm1215, %v1213, 1.0
        %v1217 = vrcp.pop %v1216
        %v1218 = vmul.f32 %v1216, %v1217
        %v1219 = vsub.f32 1.0, %v1218
        %v1220 = vmul.f32 %v1217, %v1219
        %v1221 = vadd.f32 %v1217, %v1220
        %vm1222 = vweird.f32 %v1216
        %vm1223 = vweird.f32 %v1217
        %vm1224 = vmor %vm1222, %vm1223
        %v1225 = vsel %vm1224, %v1217, %v1221
        %v1226 = vand.u32 2147483647, %v1216
        %vm1227 = vcmp.eq.f32.partialorder %v1226, 8.507059e+37
        %v1228 = vand.u32 %v1216, 2147483648
        %v1229 = vor.u32 1.1754944e-38, %v1228
        %v1230 = vsel %vm1227, %v1229, %v1225
        %v1231 = vmul.f32 %v1209, %v1230
        %v1232 = vsel %vm1215, %v1231, 0.0
        %v1233 = vsub.f32 %v1204, %v1232
        %v1234 = vsub.f32 %v1087, %v1233
        %v1235 = vmul.f32 %v1234, %v1233
        %v1236 = vsub.f32 %v1235, %v1112
        %v1237 = vmul.f32 %v1236, %v1233
        %v1238 = vadd.f32 %v1237, %v1148
        %v1239 = vmul.f32 %v1233, 3.0
        %v1240 = vsub.f32 %v1153, %v1239
        %v1241 = vmul.f32 %v1240, %v1233
        %v1242 = vsub.f32 %v1241, %v1112
        %v1243 = vand.u32 2147483647, %v1242
        %vm1244 = vcmp.gt.f32.partialorder %v1243, 1e-20
        %v1245 = vsel %vm1244, %v1242, 1.0
        %v1246 = vrcp.pop %v1245
        %v1247 = vmul.f32 %v1245, %v1246
        %v1248 = vsub.f32 1.0, %v1247
        %v1249 = vmul.f32 %v1246, %v1248
        %v1250 = vadd.f32 %v1246, %v1249
        %vm1251 = vweird.f32 %v1245
        %vm1252 = vweird.f32 %v1246
        %vm1253 = vmor %vm1251, %vm1252
        %v1254 = vsel %vm1253, %v1246, %v1250
        %v1255 = vand.u32 2147483647, %v1245
        %vm1256 = vcmp.eq.f32.partialorder %v1255, 8.507059e+37
        %v1257 = vand.u32 %v1245, 2147483648
        %v1258 = vor.u32 1.1754944e-38, %v1257
        %v1259 = vsel %vm1256, %v1258, %v1254
        %v1260 = vmul.f32 %v1238, %v1259
        %v1261 = vsel %vm1244, %v1260, 0.0
        %v1262 = vsub.f32 %v1233, %v1261
        %v1263 = vsub.f32 %v1087, %v1262
        %v1264 = vmul.f32 %v1263, %v1262
        %v1265 = vsub.f32 %v1264, %v1112
        %v1266 = vmul.f32 %v1265, %v1262
        %v1267 = vadd.f32 %v1266, %v1148
        %v1268 = vmul.f32 %v1262, 3.0
        %v1269 = vsub.f32 %v1153, %v1268
        %v1270 = vmul.f32 %v1269, %v1262
        %v1271 = vsub.f32 %v1270, %v1112
        %v1272 = vand.u32 2147483647, %v1271
        %vm1273 = vcmp.gt.f32.partialorder %v1272, 1e-20
        %v1274 = vsel %vm1273, %v1271, 1.0
        %v1275 = vrcp.pop %v1274
        %v1276 = vmul.f32 %v1274, %v1275
        %v1277 = vsub.f32 1.0, %v1276
        %v1278 = vmul.f32 %v1275, %v1277
        %v1279 = vadd.f32 %v1275, %v1278
        %vm1280 = vweird.f32 %v1274
        %vm1281 = vweird.f32 %v1275
        %vm1282 = vmor %vm1280, %vm1281
        %v1283 = vsel %vm1282, %v1275, %v1279
        %v1284 = vand.u32 2147483647, %v1274
        %vm1285 = vcmp.eq.f32.partialorder %v1284, 8.507059e+37
        %v1286 = vand.u32 %v1274, 2147483648
        %v1287 = vor.u32 1.1754944e-38, %v1286
        %v1288 = vsel %vm1285, %v1287, %v1283
        %v1289 = vmul.f32 %v1267, %v1288
        %v1290 = vsel %vm1273, %v1289, 0.0
        %v1291 = vsub.f32 %v1262, %v1290
        %v1292 = vsub.f32 %v1087, %v1291
        %v1293 = vmul.f32 %v1292, %v1291
        %v1294 = vsub.f32 %v1293, %v1112
        %v1295 = vmul.f32 %v1294, %v1291
        %v1296 = vadd.f32 %v1295, %v1148
        %v1297 = vmul.f32 %v1291, 3.0
        %v1298 = vsub.f32 %v1153, %v1297
        %v1299 = vmul.f32 %v1298, %v1291
        %v1300 = vsub.f32 %v1299, %v1112
        %v1301 = vand.u32 2147483647, %v1300
        %vm1302 = vcmp.gt.f32.partialorder %v1301, 1e-20
        %v1303 = vsel %vm1302, %v1300, 1.0
        %v1304 = vrcp.pop %v1303
        %v1305 = vmul.f32 %v1303, %v1304
        %v1306 = vsub.f32 1.0, %v1305
        %v1307 = vmul.f32 %v1304, %v1306
        %v1308 = vadd.f32 %v1304, %v1307
        %vm1309 = vweird.f32 %v1303
        %vm1310 = vweird.f32 %v1304
        %vm1311 = vmor %vm1309, %vm1310
        %v1312 = vsel %vm1311, %v1304, %v1308
        %v1313 = vand.u32 2147483647, %v1303
        %vm1314 = vcmp.eq.f32.partialorder %v1313, 8.507059e+37
        %v1315 = vand.u32 %v1303, 2147483648
        %v1316 = vor.u32 1.1754944e-38, %v1315
        %v1317 = vsel %vm1314, %v1316, %v1312
        %v1318 = vmul.f32 %v1296, %v1317
        %v1319 = vsel %vm1302, %v1318, 0.0
        %v1320 = vsub.f32 %v1291, %v1319
        %v1321 = vsub.f32 %v1087, %v1320
        %v1322 = vmul.f32 %v1321, %v1320
        %v1323 = vsub.f32 %v1322, %v1112
        %v1324 = vmul.f32 %v1323, %v1320
        %v1325 = vadd.f32 %v1324, %v1148
        %v1326 = vmul.f32 %v1320, 3.0
        %v1327 = vsub.f32 %v1153, %v1326
        %v1328 = vmul.f32 %v1327, %v1320
        %v1329 = vsub.f32 %v1328, %v1112
        %v1330 = vand.u32 2147483647, %v1329
        %vm1331 = vcmp.gt.f32.partialorder %v1330, 1e-20
        %v1332 = vsel %vm1331, %v1329, 1.0
        %v1333 = vrcp.pop %v1332
        %v1334 = vmul.f32 %v1332, %v1333
        %v1335 = vsub.f32 1.0, %v1334
        %v1336 = vmul.f32 %v1333, %v1335
        %v1337 = vadd.f32 %v1333, %v1336
        %vm1338 = vweird.f32 %v1332
        %vm1339 = vweird.f32 %v1333
        %vm1340 = vmor %vm1338, %vm1339
        %v1341 = vsel %vm1340, %v1333, %v1337
        %v1342 = vand.u32 2147483647, %v1332
        %vm1343 = vcmp.eq.f32.partialorder %v1342, 8.507059e+37
        %v1344 = vand.u32 %v1332, 2147483648
        %v1345 = vor.u32 1.1754944e-38, %v1344
        %v1346 = vsel %vm1343, %v1345, %v1341
        %v1347 = vmul.f32 %v1325, %v1346
        %v1348 = vsel %vm1331, %v1347, 0.0
        %v1349 = vsub.f32 %v1320, %v1348
        %v1350 = vsub.f32 %v1087, %v1349
        %v1351 = vmul.f32 %v1350, %v1349
        %v1352 = vsub.f32 %v1351, %v1112
        %v1353 = vmul.f32 %v1352, %v1349
        %v1354 = vadd.f32 %v1353, %v1148
        %v1355 = vmul.f32 %v1349, 3.0
        %v1356 = vsub.f32 %v1153, %v1355
        %v1357 = vmul.f32 %v1356, %v1349
        %v1358 = vsub.f32 %v1357, %v1112
        %v1359 = vand.u32 2147483647, %v1358
        %vm1360 = vcmp.gt.f32.partialorder %v1359, 1e-20
        %v1361 = vsel %vm1360, %v1358, 1.0
        %v1362 = vrcp.pop %v1361
        %v1363 = vmul.f32 %v1361, %v1362
        %v1364 = vsub.f32 1.0, %v1363
        %v1365 = vmul.f32 %v1362, %v1364
        %v1366 = vadd.f32 %v1362, %v1365
        %vm1367 = vweird.f32 %v1361
        %vm1368 = vweird.f32 %v1362
        %vm1369 = vmor %vm1367, %vm1368
        %v1370 = vsel %vm1369, %v1362, %v1366
        %v1371 = vand.u32 2147483647, %v1361
        %vm1372 = vcmp.eq.f32.partialorder %v1371, 8.507059e+37
        %v1373 = vand.u32 %v1361, 2147483648
        %v1374 = vor.u32 1.1754944e-38, %v1373
        %v1375 = vsel %vm1372, %v1374, %v1370
        %v1376 = vmul.f32 %v1354, %v1375
        %v1377 = vsel %vm1360, %v1376, 0.0
        %v1378 = vsub.f32 %v1349, %v1377
        %v1379 = vsub.f32 %v1087, %v1378
        %v1380 = vmul.f32 %v1379, %v1378
        %v1381 = vsub.f32 %v1380, %v1112
        %v1382 = vmul.f32 %v1381, %v1378
        %v1383 = vadd.f32 %v1382, %v1148
        %v1384 = vmul.f32 %v1378, 3.0
        %v1385 = vsub.f32 %v1153, %v1384
        %v1386 = vmul.f32 %v1385, %v1378
        %v1387 = vsub.f32 %v1386, %v1112
        %v1388 = vand.u32 2147483647, %v1387
        %vm1389 = vcmp.gt.f32.partialorder %v1388, 1e-20
        %v1390 = vsel %vm1389, %v1387, 1.0
        %v1391 = vrcp.pop %v1390
        %v1392 = vmul.f32 %v1390, %v1391
        %v1393 = vsub.f32 1.0, %v1392
        %v1394 = vmul.f32 %v1391, %v1393
        %v1395 = vadd.f32 %v1391, %v1394
        %vm1396 = vweird.f32 %v1390
        %vm1397 = vweird.f32 %v1391
        %vm1398 = vmor %vm1396, %vm1397
        %v1399 = vsel %vm1398, %v1391, %v1395
        %v1400 = vand.u32 2147483647, %v1390
        %vm1401 = vcmp.eq.f32.partialorder %v1400, 8.507059e+37
        %v1402 = vand.u32 %v1390, 2147483648
        %v1403 = vor.u32 1.1754944e-38, %v1402
        %v1404 = vsel %vm1401, %v1403, %v1399
        %v1405 = vmul.f32 %v1383, %v1404
        %v1406 = vsel %vm1389, %v1405, 0.0
        %v1407 = vsub.f32 %v1378, %v1406
        %v1408 = vsub.f32 %v1087, %v1407
        %v1409 = vmul.f32 %v1408, %v1407
        %v1410 = vsub.f32 %v1409, %v1112
        %v1411 = vmul.f32 %v1410, %v1407
        %v1412 = vadd.f32 %v1411, %v1148
        %v1413 = vmul.f32 %v1407, 3.0
        %v1414 = vsub.f32 %v1153, %v1413
        %v1415 = vmul.f32 %v1414, %v1407
        %v1416 = vsub.f32 %v1415, %v1112
        %v1417 = vand.u32 2147483647, %v1416
        %vm1418 = vcmp.gt.f32.partialorder %v1417, 1e-20
        %v1419 = vsel %vm1418, %v1416, 1.0
        %v1420 = vrcp.pop %v1419
        %v1421 = vmul.f32 %v1419, %v1420
        %v1422 = vsub.f32 1.0, %v1421
        %v1423 = vmul.f32 %v1420, %v1422
        %v1424 = vadd.f32 %v1420, %v1423
        %vm1425 = vweird.f32 %v1419
        %vm1426 = vweird.f32 %v1420
        %vm1427 = vmor %vm1425, %vm1426
        %v1428 = vsel %vm1427, %v1420, %v1424
        %v1429 = vand.u32 2147483647, %v1419
        %vm1430 = vcmp.eq.f32.partialorder %v1429, 8.507059e+37
        %v1431 = vand.u32 %v1419, 2147483648
        %v1432 = vor.u32 1.1754944e-38, %v1431
        %v1433 = vsel %vm1430, %v1432, %v1428
        %v1434 = vmul.f32 %v1412, %v1433
        %v1435 = vsel %vm1418, %v1434, 0.0
        %v1436 = vsub.f32 %v1407, %v1435
        %v1437 = vsub.f32 %v1087, %v1436
        %v1438 = vmul.f32 %v1437, %v1436
        %v1439 = vsub.f32 %v1438, %v1112
        %v1440 = vmul.f32 %v1439, %v1436
        %v1441 = vadd.f32 %v1440, %v1148
        %v1442 = vmul.f32 %v1436, 3.0
        %v1443 = vsub.f32 %v1153, %v1442
        %v1444 = vmul.f32 %v1443, %v1436
        %v1445 = vsub.f32 %v1444, %v1112
        %v1446 = vand.u32 2147483647, %v1445
        %vm1447 = vcmp.gt.f32.partialorder %v1446, 1e-20
        %v1448 = vsel %vm1447, %v1445, 1.0
        %v1449 = vrcp.pop %v1448
        %v1450 = vmul.f32 %v1448, %v1449
        %v1451 = vsub.f32 1.0, %v1450
        %v1452 = vmul.f32 %v1449, %v1451
        %v1453 = vadd.f32 %v1449, %v1452
        %vm1454 = vweird.f32 %v1448
        %vm1455 = vweird.f32 %v1449
        %vm1456 = vmor %vm1454, %vm1455
        %v1457 = vsel %vm1456, %v1449, %v1453
        %v1458 = vand.u32 2147483647, %v1448
        %vm1459 = vcmp.eq.f32.partialorder %v1458, 8.507059e+37
        %v1460 = vand.u32 %v1448, 2147483648
        %v1461 = vor.u32 1.1754944e-38, %v1460
        %v1462 = vsel %vm1459, %v1461, %v1457
        %v1463 = vmul.f32 %v1441, %v1462
        %v1464 = vsel %vm1447, %v1463, 0.0
        %v1465 = vsub.f32 %v1436, %v1464
        %v1466 = vsub.f32 %v1087, %v1465
        %v1467 = vmul.f32 %v1466, %v1465
        %v1468 = vsub.f32 %v1467, %v1112
        %v1469 = vmul.f32 %v1468, %v1465
        %v1470 = vadd.f32 %v1469, %v1148
        %v1471 = vmul.f32 %v1465, 3.0
        %v1472 = vsub.f32 %v1153, %v1471
        %v1473 = vmul.f32 %v1472, %v1465
        %v1474 = vsub.f32 %v1473, %v1112
        %v1475 = vand.u32 2147483647, %v1474
        %vm1476 = vcmp.gt.f32.partialorder %v1475, 1e-20
        %v1477 = vsel %vm1476, %v1474, 1.0
        %v1478 = vrcp.pop %v1477
        %v1479 = vmul.f32 %v1477, %v1478
        %v1480 = vsub.f32 1.0, %v1479
        %v1481 = vmul.f32 %v1478, %v1480
        %v1482 = vadd.f32 %v1478, %v1481
        %vm1483 = vweird.f32 %v1477
        %vm1484 = vweird.f32 %v1478
        %vm1485 = vmor %vm1483, %vm1484
        %v1486 = vsel %vm1485, %v1478, %v1482
        %v1487 = vand.u32 2147483647, %v1477
        %vm1488 = vcmp.eq.f32.partialorder %v1487, 8.507059e+37
        %v1489 = vand.u32 %v1477, 2147483648
        %v1490 = vor.u32 1.1754944e-38, %v1489
        %v1491 = vsel %vm1488, %v1490, %v1486
        %v1492 = vmul.f32 %v1470, %v1491
        %v1493 = vsel %vm1476, %v1492, 0.0
        %v1494 = vsub.f32 %v1465, %v1493
        %v1495 = vsub.f32 %v1087, %v1494
        %v1496 = vmul.f32 %v1495, %v1494
        %v1497 = vsub.f32 %v1496, %v1112
        %v1498 = vmul.f32 %v1497, %v1494
        %v1499 = vadd.f32 %v1498, %v1148
        %v1500 = vmul.f32 %v1494, 3.0
        %v1501 = vsub.f32 %v1153, %v1500
        %v1502 = vmul.f32 %v1501, %v1494
        %v1503 = vsub.f32 %v1502, %v1112
        %v1504 = vand.u32 2147483647, %v1503
        %vm1505 = vcmp.gt.f32.partialorder %v1504, 1e-20
        %v1506 = vsel %vm1505, %v1503, 1.0
        %v1507 = vrcp.pop %v1506
        %v1508 = vmul.f32 %v1506, %v1507
        %v1509 = vsub.f32 1.0, %v1508
        %v1510 = vmul.f32 %v1507, %v1509
        %v1511 = vadd.f32 %v1507, %v1510
        %vm1512 = vweird.f32 %v1506
        %vm1513 = vweird.f32 %v1507
        %vm1514 = vmor %vm1512, %vm1513
        %v1515 = vsel %vm1514, %v1507, %v1511
        %v1516 = vand.u32 2147483647, %v1506
        %vm1517 = vcmp.eq.f32.partialorder %v1516, 8.507059e+37
        %v1518 = vand.u32 %v1506, 2147483648
        %v1519 = vor.u32 1.1754944e-38, %v1518
        %v1520 = vsel %vm1517, %v1519, %v1515
        %v1521 = vmul.f32 %v1499, %v1520
        %v1522 = vsel %vm1505, %v1521, 0.0
        %v1523 = vsub.f32 %v1494, %v1522
        %v1524 = vsub.f32 %v1087, %v1523
        %v1525 = vmul.f32 %v1524, %v1523
        %v1526 = vsub.f32 %v1525, %v1112
        %v1527 = vmul.f32 %v1526, %v1523
        %v1528 = vadd.f32 %v1527, %v1148
        %v1529 = vmul.f32 %v1523, 3.0
        %v1530 = vsub.f32 %v1153, %v1529
        %v1531 = vmul.f32 %v1530, %v1523
        %v1532 = vsub.f32 %v1531, %v1112
        %v1533 = vand.u32 2147483647, %v1532
        %vm1534 = vcmp.gt.f32.partialorder %v1533, 1e-20
        %v1535 = vsel %vm1534, %v1532, 1.0
        %v1536 = vrcp.pop %v1535
        %v1537 = vmul.f32 %v1535, %v1536
        %v1538 = vsub.f32 1.0, %v1537
        %v1539 = vmul.f32 %v1536, %v1538
        %v1540 = vadd.f32 %v1536, %v1539
        %vm1541 = vweird.f32 %v1535
        %vm1542 = vweird.f32 %v1536
        %vm1543 = vmor %vm1541, %vm1542
        %v1544 = vsel %vm1543, %v1536, %v1540
        %v1545 = vand.u32 2147483647, %v1535
        %vm1546 = vcmp.eq.f32.partialorder %v1545, 8.507059e+37
        %v1547 = vand.u32 %v1535, 2147483648
        %v1548 = vor.u32 1.1754944e-38, %v1547
        %v1549 = vsel %vm1546, %v1548, %v1544
        %v1550 = vmul.f32 %v1528, %v1549
        %v1551 = vsel %vm1534, %v1550, 0.0
        %v1552 = vsub.f32 %v1523, %v1551
        %v1553 = vsub.f32 %v1087, %v1552
        %v1554 = vmul.f32 %v1553, %v1552
        %v1555 = vsub.f32 %v1554, %v1112
        %v1556 = vmul.f32 %v1555, %v1552
        %v1557 = vadd.f32 %v1556, %v1148
        %v1558 = vmul.f32 %v1552, 3.0
        %v1559 = vsub.f32 %v1153, %v1558
        %v1560 = vmul.f32 %v1559, %v1552
        %v1561 = vsub.f32 %v1560, %v1112
        %v1562 = vand.u32 2147483647, %v1561
        %vm1563 = vcmp.gt.f32.partialorder %v1562, 1e-20
        %v1564 = vsel %vm1563, %v1561, 1.0
        %v1565 = vrcp.pop %v1564
        %v1566 = vmul.f32 %v1564, %v1565
        %v1567 = vsub.f32 1.0, %v1566
        %v1568 = vmul.f32 %v1565, %v1567
        %v1569 = vadd.f32 %v1565, %v1568
        %vm1570 = vweird.f32 %v1564
        %vm1571 = vweird.f32 %v1565
        %vm1572 = vmor %vm1570, %vm1571
        %v1573 = vsel %vm1572, %v1565, %v1569
        %v1574 = vand.u32 2147483647, %v1564
        %vm1575 = vcmp.eq.f32.partialorder %v1574, 8.507059e+37
        %v1576 = vand.u32 %v1564, 2147483648
        %v1577 = vor.u32 1.1754944e-38, %v1576
        %v1578 = vsel %vm1575, %v1577, %v1573
        %v1579 = vmul.f32 %v1557, %v1578
        %v1580 = vsel %vm1563, %v1579, 0.0
        %v1581 = vsub.f32 %v1552, %v1580
        %v1582 = vsub.f32 %v1087, %v1581
        %v1583 = vmul.f32 %v1582, %v1581
        %v1584 = vsub.f32 %v1583, %v1112
        %v1585 = vmul.f32 %v1584, %v1581
        %v1586 = vadd.f32 %v1585, %v1148
        %v1587 = vmul.f32 %v1581, 3.0
        %v1588 = vsub.f32 %v1153, %v1587
        %v1589 = vmul.f32 %v1588, %v1581
        %v1590 = vsub.f32 %v1589, %v1112
        %v1591 = vand.u32 2147483647, %v1590
        %vm1592 = vcmp.gt.f32.partialorder %v1591, 1e-20
        %v1593 = vsel %vm1592, %v1590, 1.0
        %v1594 = vrcp.pop %v1593
        %v1595 = vmul.f32 %v1593, %v1594
        %v1596 = vsub.f32 1.0, %v1595
        %v1597 = vmul.f32 %v1594, %v1596
        %v1598 = vadd.f32 %v1594, %v1597
        %vm1599 = vweird.f32 %v1593
        %vm1600 = vweird.f32 %v1594
        %vm1601 = vmor %vm1599, %vm1600
        %v1602 = vsel %vm1601, %v1594, %v1598
        %v1603 = vand.u32 2147483647, %v1593
        %vm1604 = vcmp.eq.f32.partialorder %v1603, 8.507059e+37
        %v1605 = vand.u32 %v1593, 2147483648
        %v1606 = vor.u32 1.1754944e-38, %v1605
        %v1607 = vsel %vm1604, %v1606, %v1602
        %v1608 = vmul.f32 %v1586, %v1607
        %v1609 = vsel %vm1592, %v1608, 0.0
        %v1610 = vsub.f32 %v1581, %v1609
        %v1611 = vsub.f32 %v1063, %v1610
        %v1613 = vrot.slane %v1610, 5
        %v1615 = vsub.f32 %v1073, %v1613
        %v1616 = vrot.slane %v1610, 3
        %v1618 = vsub.f32 %v1079, %v1616
        %v1620 = vrot.slane %v1615, 1
        %v1622 = vmul.f32 %v1070, %v1620
        %v1624 = vrot.slane %v1622, 1
        %v1626 = vsub.f32 %v1133, %v1624
        %v1628 = vrot.slane %v1067, 7
        %v1630 = vmul.f32 %v1070, %v1628
        %v1631 = vrot.slane %v1076, 4
        %v1633 = vmul.f32 %v1611, %v1631
        %v1635 = vrot.slane %v1633, 6
        %v1637 = vsub.f32 %v1630, %v1635
        %v1638 = vrot.slane %v1615, 3
        %v1640 = vmul.f32 %v1611, %v1638
        %v1641 = vsub.f32 %v1640, %v1091
        %v1643 = vrot.slane %v1618, 4
        %v1645 = vmul.f32 %v1067, %v1643
        %v1646 = vsub.f32 %v1645, %v1122
        %v1647 = vrot.slane %v1618, 5
        %v1649 = vmul.f32 %v1611, %v1647
        %v1651 = vrot.slane %v1649, 6
        %v1653 = vsub.f32 %v1095, %v1651
        %v1655 = vrot.slane %v1630, 2
        %v1657 = vsub.f32 %v1633, %v1655
        %v1658 = vrot.slane %v1618, 2
        %v1660 = vmul.f32 %v1615, %v1658
        %v1661 = vsub.f32 %v1660, %v1106
        %v1663 = vrot.slane %v1645, 5
        %v1665 = vsub.f32 %v1120, %v1663
        %v1666 = vmul.f32 %v1626, %v1626
        %v1667 = vmul.f32 %v1637, %v1637
        %v1669 = vrot.slane %v1667, 1
        %v1671 = vadd.f32 %v1666, %v1669
        %v1672 = vmul.f32 %v1641, %v1641
        %v1674 = vrot.slane %v1672, 7
        %v1676 = vadd.f32 %v1671, %v1674
        %v1677 = vmul.f32 %v1646, %v1646
        %v1678 = vmul.f32 %v1653, %v1653
        %v1680 = vrot.slane %v1678, 1
        %v1682 = vadd.f32 %v1677, %v1680
        %v1683 = vmul.f32 %v1657, %v1657
        %v1685 = vrot.slane %v1683, 7
        %v1687 = vadd.f32 %v1682, %v1685
        %v1688 = vmul.f32 %v1661, %v1661
        %v1689 = vmul.f32 %v1665, %v1665
        %v1691 = vrot.slane %v1689, 1
        %v1693 = vadd.f32 %v1688, %v1691
        %v1695 = vrot.slane %v1666, 6
        %v1697 = vadd.f32 %v1693, %v1695
        %vm1698 = vcmp.gt.f32.partialorder %v1687, %v1676
        %v1699 = vsel %vm1698, %v1646, %v1626
        %v1701 = vrot.slane %v1653, 1
        %v1704 = vrot.slane %v1637, 1
        %v1706 = vsel %vm1698, %v1701, %v1704
        %v1708 = vrot.slane %v1657, 7
        %v1711 = vrot.slane %v1641, 7
        %v1713 = vsel %vm1698, %v1708, %v1711
        %v1714 = vsel %vm1698, %v1687, %v1676
        %v1716 = vrot.slane %v1714, 6
        %vm1718 = vcmp.gt.f32.partialorder %v1697, %v1716
        %v1720 = vrot.slane %v1699, 6
        %v1722 = vsel %vm1718, %v1661, %v1720
        %v1724 = vrot.slane %v1665, 1
        %v1727 = vrot.slane %v1706, 6
        %v1729 = vsel %vm1718, %v1724, %v1727
        %v1731 = vrot.slane %v1626, 6
        %v1734 = vrot.slane %v1713, 6
        %v1736 = vsel %vm1718, %v1731, %v1734
        %v1737 = vsel %vm1718, %v1697, %v1716
        %vm1738 = vcmp.lt.f32.partialorder %v1737, 1e-20
        %v1739 = vmax.f32 %v1737, 1e-30
        %v1740 = vrsqrt.pop %v1739
        %v1741 = vmul.f32 %v1740, %v1739
        %v1742 = vmul.f32 %v1741, %v1740
        %v1743 = vmul.f32 0.5, %v1742
        %v1744 = vsub.f32 1.5, %v1743
        %v1745 = vmul.f32 %v1740, %v1744
        %vm1746 = vweird.f32 %v1739
        %vm1747 = vweird.f32 %v1740
        %vm1748 = vmor %vm1746, %vm1747
        %v1749 = vsel %vm1748, %v1740, %v1745
        %v1750 = vmul.f32 %v1722, %v1749
        %v1751 = vsel %vm1738, 0.0, %v1750
        %v1752 = vmul.f32 %v1729, %v1749
        %v1753 = vsel %vm1738, 0.0, %v1752
        %v1754 = vmul.f32 %v1736, %v1749
        %v1755 = vsel %vm1738, 1.0, %v1754
        %v1756 = vlaneseq
        %v1757 = vshrl.u32 %v1756, 7
        %vm1758 = vcmp.eq.s32.totalorder %v1757, 0
        %v1759 = vsel %vm1758, 1, 0
        %v1760 = vcvt.s32.f32 %v1759
        %v1761 = vperm.slane %v1751, 7
        %v1762 = vmul.f32 %v1761, %v1760
        %vm1763 = vcmp.eq.s32.totalorder %v1757, 1
        %v1764 = vsel %vm1763, 1, 0
        %v1765 = vcvt.s32.f32 %v1764
        %v1766 = vperm.slane %v1753, 7
        %v1767 = vmul.f32 %v1766, %v1765
        %v1768 = vadd.f32 %v1762, %v1767
        %vm1769 = vcmp.eq.s32.totalorder %v1757, 2
        %v1770 = vsel %vm1769, 1, 0
        %v1771 = vcvt.s32.f32 %v1770
        %v1772 = vperm.slane %v1755, 7
        %v1773 = vmul.f32 %v1772, %v1771
        %v1774 = vadd.f32 %v1768, %v1773
        %1775 = vst [vmem:[%s161] sm:$0xff] %v1774
        %s1776 = sand.u32 %s93, 1
        %s1777 = scalar_lea.sflag [#allocation3], %s1776
        %s1778 = sand.u32 %s93, 1
        %s1779 = smul.addr %s1778, 8
        %s1780 = scalar_lea.vmem [#allocation2], %s1779
        // Predicated region
        $region33: #{tpu_custom_call.1} parent=31 // pred_check
          %p1781 = pneg %p103
        $region34: #{tpu_custom_call.1} parent=31 // pred_check_branch
          %1783 = sbr.rel (%p1781) target = $region36
        $region35: #{tpu_custom_call.1} parent=31 // pred_region
          %1785 = vsyncadd %s1777, 0
          %s1786 = smul.addr %s17, 8
          %s1787 = scalar_lea.hbm %s3, %s1786
          %s1789 = sshll.u32 %s1780, 4
          %s1790 = int_to_ptr.vmem [resolvable:$true] %s1789
          %s1791 = sshll.u32 %s1787, 4
          %s1792 = int_to_ptr.hbm [resolvable:$true] %s1791
          %1794 = dma.vmem_to_hbm [thread:$0]  %s1790, 128, %s1792, %s1777
        $region36: #{tpu_custom_call.1} parent=31 // pred_fallthru
          _
      $region32: #{tpu_custom_call.1} parent=5 // pred_fallthru
        _
      %p1795 = scmp.le.s32.totalorder 2, %s12
      // Predicated region
      $region37: #{tpu_custom_call.1} parent=5 // pred_check
        %p1796 = pneg %p1795
      $region38: #{tpu_custom_call.1} parent=5 // pred_check_branch
        %1798 = sbr.rel (%p1796) target = $region40
      $region39: #{tpu_custom_call.1} parent=5 // pred_region
        %s1799 = ssub.s32 %s12, 2
        // Predicated region
        $region41: #{tpu_custom_call.1} parent=39 // pred_check
          %p1800 = pneg %p109
        $region42: #{tpu_custom_call.1} parent=39 // pred_check_branch
          %1802 = sbr.rel (%p1800) target = $region44
        $region43: #{tpu_custom_call.1} parent=39 // pred_region
          %s1803 = sand.u32 %s94, 1
          %s1804 = scalar_lea.sflag [#allocation3], %s1803
          %s1805 = sand.u32 %s94, 1
          %s1806 = smul.addr %s1805, 8
          %s1807 = scalar_lea.vmem [#allocation2], %s1806
          %1809 = dma.done %s1804, 128
        $region44: #{tpu_custom_call.1} parent=39 // pred_fallthru
          _
      $region40: #{tpu_custom_call.1} parent=5 // pred_fallthru
        _
    $region6: #{tpu_custom_call.1} parent=1 // loop_footer
      %s16 = sadd.s32 1, %s12
    $region7: #{tpu_custom_call.1} parent=1 // loop_footer_branch
      %11 = sbr.rel target = $region3
    $region8: #{tpu_custom_call.1} parent=1 // loop_exit
      _
    %1810 = vsyncpa [#allocation3], 1
    %s1811 = scalar_lea.sflag [#allocation3], 1
    %1812 = vsyncpa %s1811, 1

</llo_original>
